<compile_context>
chip_gen: v7x
topology: tpu7x:2x2x1
jax: 0.10.0
libtpu: 0.0.40
codegen_flags: <defaults>
</compile_context>

<pallas_src>
import math

import jax
import jax.numpy as jnp
from jax import lax
from jax.experimental import pallas as pl
from jax.experimental.pallas import tpu as pltpu

# ----------------------- small synthetic BERT config -----------------------
VOCAB = 100        # synthetic vocab
B, S = 2, 8        # batch, sequence length
H = 32             # hidden size ("feature_dim")
NH = 2             # attention heads
DH = H // NH       # head dim
FF = 64            # intermediate (FFN) size
L = 2              # number of encoder layers
OUT = 48           # output_dim != feature_dim -> projection Linear is used
LN_EPS = 1e-12     # BERT LayerNorm eps

BS = B * S         # rows after folding batch into the sublane axis
G = NH * B         # attention "batch" = heads x batch
NEG_INF = -1e9
LANES = 128
OUT_PAD = 128      # lane-dense output slab width (OUT zero-padded)


# ------------------------------ kernel helpers ------------------------------
def _layer_norm(x, gamma, beta):
    mu = jnp.mean(x, axis=-1, keepdims=True)
    var = jnp.mean((x - mu) ** 2, axis=-1, keepdims=True)
    return (x - mu) * lax.rsqrt(var + LN_EPS) * gamma + beta


def _gelu(x):
    # TODO(synk): BERT uses erf-GELU; tanh approximation used for robust
    # in-kernel TPU lowering (numerically very close, exp/tanh go to the EUP).
    c = math.sqrt(2.0 / math.pi)
    return 0.5 * x * (1.0 + jnp.tanh(c * (x + 0.044715 * x * x * x)))


# ------------------------------- fused kernel --------------------------------
def text_encoder_kernel(emb_ref, mask_ref, gvec_ref, lvec_ref,
                        wqkv_ref, wo_ref, w1_ref, w2_ref, pw_ref, o_ref):
    # Packed global small params: row 0 emb_ln_gamma, 1 emb_ln_beta, 2 proj_bias.
    gv = gvec_ref[...]                       # [8, 128] f32
    eg = gv[0:1, 0:H]
    eb = gv[1:2, 0:H]
    pb = gv[2:3, :]                          # [1, OUT_PAD]

    # Embedding LayerNorm; x stays [BS, H] f32 in registers/VMEM for the pass.
    x = _layer_norm(emb_ref[...], eg, eb)

    # Additive key-padding mask, [G, 1, S] with g = head*B + batch (built in the
    # wrapper; O(NH*B*S) floats, no [B,S,S] / [R,R] mask is ever materialized).
    # NOTE: a fully-padded sequence yields uniform attention over its (invalid)
    # keys — same behavior as HuggingFace BERT's -10000 extended mask.
    add_mask = mask_ref[...]

    # TODO(synk): at real BERT sizes, stream per-layer weights with grid=(L,)
    # marked "arbitrary" (BlockSpec index_map l->(l,...), activation carried in
    # a VMEM scratch, pl.when init/finalize) and add a "parallel" row-tile grid
    # axis so both v7x TensorCores get work; at these toy shapes the all-resident
    # grid-less form is best.
    for l in range(L):                       # static unroll, L is tiny
        # Packed per-layer small params:
        # row 0 bqkv | 1 bo | 2 ln1_g | 3 ln1_b | 4 b1 | 5 b2 | 6 ln2_g | 7 ln2_b
        lv = lvec_ref[l]                     # [8, 128] f32
        bqkv = lv[0:1, 0:3 * H]
        bo = lv[1:2, 0:H]
        g1 = lv[2:3, 0:H]
        b1 = lv[3:4, 0:H]
        bf1 = lv[4:5, 0:FF]
        bf2 = lv[5:6, 0:H]
        g2 = lv[6:7, 0:H]
        b2 = lv[7:8, 0:H]

        # Fused QKV projection (bf16 operands -> f32 accumulate on the MXU).
        qkv = jnp.dot(x.astype(jnp.bfloat16), wqkv_ref[l],
                      preferred_element_type=jnp.float32) + bqkv     # [BS, 3H]
        q = qkv[:, 0:H]            # 1/sqrt(DH) already folded into Wq at init
        k = qkv[:, H:2 * H]
        v = qkv[:, 2 * H:3 * H]

        # Per-head batched layout [G, S, DH], g = head*B + batch.
        qg = jnp.concatenate(
            [q[:, h * DH:(h + 1) * DH].reshape(B, S, DH) for h in range(NH)], axis=0)
        kg = jnp.concatenate(
            [k[:, h * DH:(h + 1) * DH].reshape(B, S, DH) for h in range(NH)], axis=0)
        vg = jnp.concatenate(
            [v[:, h * DH:(h + 1) * DH].reshape(B, S, DH) for h in range(NH)], axis=0)

        # Batched QK^T / softmax / PV: G small matmuls, not one (G*S)^2 matmul.
        sc = jnp.einsum('gqd,gkd->gqk',
                        qg.astype(jnp.bfloat16), kg.astype(jnp.bfloat16),
                        preferred_element_type=jnp.float32)          # [G, S, S]
        sc = sc + add_mask
        sc = sc - jnp.max(sc, axis=-1, keepdims=True)
        p = jnp.exp(sc)
        p = p * pl.reciprocal(jnp.sum(p, axis=-1, keepdims=True), approx=True)
        c = jnp.einsum('gqk,gkd->gqd',
                       p.astype(jnp.bfloat16), vg.astype(jnp.bfloat16),
                       preferred_element_type=jnp.float32)           # [G, S, DH]
        ctx = jnp.concatenate(
            [c[h * B:(h + 1) * B].reshape(BS, DH) for h in range(NH)], axis=1)  # [BS, H]

        attn = jnp.dot(ctx.astype(jnp.bfloat16), wo_ref[l],
                       preferred_element_type=jnp.float32) + bo
        h1 = _layer_norm(x + attn, g1, b1)

        ff = jnp.dot(h1.astype(jnp.bfloat16), w1_ref[l],
                     preferred_element_type=jnp.float32) + bf1
        ff = _gelu(ff)
        ff = jnp.dot(ff.astype(jnp.bfloat16), w2_ref[l],
                     preferred_element_type=jnp.float32) + bf2
        x = _layer_norm(h1 + ff, g2, b2)

    # Final projection into a lane-dense [BS, 128] slab (OUT zero-padded).
    y = jnp.dot(x.astype(jnp.bfloat16), pw_ref[...],
                preferred_element_type=jnp.float32) + pb
    o_ref[...] = y.astype(o_ref.dtype)


# --------------------------------- wrapper -----------------------------------
@jax.jit
def text_encoder_forward(params, input_ids, attention_mask):
    """input_ids: [B, S] int32; attention_mask: [B, S] (1 = valid, 0 = pad).
    Returns text features [B, S, OUT]."""
    # Embedding gathers (plain-JAX glue): word + position + token-type(0).
    # TODO(synk): at real vocab sizes gather in-kernel (PrefetchScalarGridSpec
    # with input_ids as scalar-prefetch + word_emb left in HBM / pl.ANY).
    emb = (params["word_emb"][input_ids]
           + params["pos_emb"][None, :, :]
           + params["type_emb"][0][None, None, :])
    emb2d = emb.reshape(BS, H).astype(jnp.float32)     # batch folded into rows

    # Additive key-padding mask [G, 1, S], g = head*B + batch. O(NH*B*S) only.
    key_add = (1.0 - attention_mask.astype(jnp.float32)) * NEG_INF     # [B, S]
    add_mask = jnp.tile(key_add[:, None, :], (NH, 1, 1))               # [G, 1, S]

    vmem = pl.BlockSpec(memory_space=pltpu.MemorySpace.VMEM)
    args = (emb2d, add_mask, params["gvec"], params["lvec"],
            params["wqkv"], params["wo"], params["w1"], params["w2"],
            params["proj_w"])

    out = pl.pallas_call(
        text_encoder_kernel,
        out_shape=jax.ShapeDtypeStruct((BS, OUT_PAD), jnp.float32),
        in_specs=[vmem] * len(args),
        out_specs=vmem,
        compiler_params=pltpu.CompilerParams(vmem_limit_bytes=64 * 1024 * 1024),
    )(*args)
    return out[:, :OUT].reshape(B, S, OUT)


# ----------------------------- parameter creation ----------------------------
def init_params(key):
    def normal(k, shape, std=0.02):
        return (std * jax.random.normal(k, shape)).astype(jnp.float32)

    ks = jax.random.split(key, 8)

    # Fold the 1/sqrt(DH) attention scale into the Q output columns of Wqkv
    # (free at runtime; 0.25 is exact in bf16).
    scale = 1.0 / math.sqrt(DH)
    wqkv = normal(ks[3], (L, H, 3 * H))
    wqkv = wqkv.at[:, :, :H].multiply(scale)

    # Packed per-layer small vectors [L, 8, 128]:
    # row 0 bqkv(3H) | 1 bo(H) | 2 ln1_g | 3 ln1_b | 4 b1(FF) | 5 b2 | 6 ln2_g | 7 ln2_b
    lvec = jnp.zeros((L, 8, LANES), jnp.float32)
    lvec = lvec.at[:, 2, :H].set(1.0)      # ln1 gamma
    lvec = lvec.at[:, 6, :H].set(1.0)      # ln2 gamma
    # biases / LN betas stay zero (BERT-style init)

    # Packed global small vectors [8, 128]: row 0 emb_ln_g | 1 emb_ln_b | 2 proj_b
    gvec = jnp.zeros((8, LANES), jnp.float32)
    gvec = gvec.at[0, :H].set(1.0)

    # Projection weight zero-padded to a lane-dense 128-wide output slab.
    proj_w = jnp.zeros((H, OUT_PAD), jnp.float32)
    proj_w = proj_w.at[:, :OUT].set(normal(ks[7], (H, OUT)))

    return {
        "word_emb": normal(ks[0], (VOCAB, H)),
        "pos_emb": normal(ks[1], (S, H)),
        "type_emb": normal(ks[2], (2, H)),
        "gvec": gvec,
        "lvec": lvec,
        # bf16 weight matrices: MXU-native on v5e/v6e/v7x, half the VMEM/DMA bytes
        "wqkv": wqkv.astype(jnp.bfloat16),
        "wo": normal(ks[4], (L, H, H)).astype(jnp.bfloat16),
        "w1": normal(ks[5], (L, H, FF)).astype(jnp.bfloat16),
        "w2": normal(ks[6], (L, FF, H)).astype(jnp.bfloat16),
        "proj_w": proj_w.astype(jnp.bfloat16),
    }


# ----------------------------------- main ------------------------------------
if __name__ == "__main__":
    key = jax.random.PRNGKey(0)
    k_param, k_ids = jax.random.split(key)

    params = init_params(k_param)

    input_ids = jax.random.randint(k_ids, (B, S), 0, VOCAB, dtype=jnp.int32)
    # example attention mask: first sequence full, second padded after 5 tokens
    attention_mask = jnp.array(
        [[1] * S, [1] * 5 + [0] * (S - 5)], dtype=jnp.int32)

    out = text_encoder_forward(params, input_ids, attention_mask)
    out = jax.block_until_ready(out)

    assert out.shape == (B, S, OUT), out.shape
    assert bool(jnp.all(jnp.isfinite(out)))
    print("KERNEL_OK")
</pallas_src>

<mosaic_0001>
module attributes {stable_mosaic.version = 11 : i64} {
  func.func @text_encoder_kernel(%arg0: memref<16x32xf32, #tpu.memory_space<vmem>>, %arg1: memref<4x1x8xf32, #tpu.memory_space<vmem>>, %arg2: memref<8x128xf32, #tpu.memory_space<vmem>>, %arg3: memref<2x8x128xf32, #tpu.memory_space<vmem>>, %arg4: memref<2x32x96xbf16, #tpu.memory_space<vmem>>, %arg5: memref<2x32x32xbf16, #tpu.memory_space<vmem>>, %arg6: memref<2x32x64xbf16, #tpu.memory_space<vmem>>, %arg7: memref<2x64x32xbf16, #tpu.memory_space<vmem>>, %arg8: memref<32x128xbf16, #tpu.memory_space<vmem>>, %arg9: memref<16x128xf32, #tpu.memory_space<vmem>>) attributes {dimension_semantics = [], scalar_prefetch = 0 : i64, scratch_operands = 0 : i64, tpu.core_type = #tpu.core_type<tc>} {
    %c0 = arith.constant 0 : index
    %c0_0 = arith.constant 0 : index
    %0 = vector.load %arg2[%c0, %c0_0] : memref<8x128xf32, #tpu.memory_space<vmem>>, vector<8x128xf32>
    %1 = vector.extract_strided_slice %0 {offsets = [0, 0], sizes = [1, 32], strides = [1, 1]} : vector<8x128xf32> to vector<1x32xf32>
    %2 = vector.extract_strided_slice %0 {offsets = [1, 0], sizes = [1, 32], strides = [1, 1]} : vector<8x128xf32> to vector<1x32xf32>
    %3 = vector.extract_strided_slice %0 {offsets = [2, 0], sizes = [1, 128], strides = [1, 1]} : vector<8x128xf32> to vector<1x128xf32>
    %c0_1 = arith.constant 0 : index
    %c0_2 = arith.constant 0 : index
    %4 = vector.load %arg0[%c0_1, %c0_2] : memref<16x32xf32, #tpu.memory_space<vmem>>, vector<16x32xf32>
    %cst = arith.constant dense<0.000000e+00> : vector<16xf32>
    %5 = vector.multi_reduction <add>, %4, %cst [1] : vector<16x32xf32> to vector<16xf32>
    %6 = vector.shape_cast %5 : vector<16xf32> to vector<16x1xf32>
    %cst_3 = arith.constant 3.200000e+01 : f32
    %7 = vector.broadcast %cst_3 : f32 to vector<16x1xf32>
    %8 = arith.divf %6, %7 : vector<16x1xf32>
    %9 = vector.broadcast %8 : vector<16x1xf32> to vector<16x32xf32>
    %10 = arith.subf %4, %9 : vector<16x32xf32>
    %11 = arith.mulf %10, %10 : vector<16x32xf32>
    %cst_4 = arith.constant dense<0.000000e+00> : vector<16xf32>
    %12 = vector.multi_reduction <add>, %11, %cst_4 [1] : vector<16x32xf32> to vector<16xf32>
    %13 = vector.shape_cast %12 : vector<16xf32> to vector<16x1xf32>
    %cst_5 = arith.constant 3.200000e+01 : f32
    %14 = vector.broadcast %cst_5 : f32 to vector<16x1xf32>
    %15 = arith.divf %13, %14 : vector<16x1xf32>
    %16 = vector.broadcast %8 : vector<16x1xf32> to vector<16x32xf32>
    %17 = arith.subf %4, %16 : vector<16x32xf32>
    %cst_6 = arith.constant 9.99999996E-13 : f32
    %18 = vector.broadcast %cst_6 : f32 to vector<16x1xf32>
    %19 = arith.addf %15, %18 : vector<16x1xf32>
    %20 = math.rsqrt %19 : vector<16x1xf32>
    %21 = vector.broadcast %20 : vector<16x1xf32> to vector<16x32xf32>
    %22 = arith.mulf %17, %21 : vector<16x32xf32>
    %23 = vector.broadcast %1 : vector<1x32xf32> to vector<16x32xf32>
    %24 = arith.mulf %22, %23 : vector<16x32xf32>
    %25 = vector.broadcast %2 : vector<1x32xf32> to vector<16x32xf32>
    %26 = arith.addf %24, %25 : vector<16x32xf32>
    %c0_7 = arith.constant 0 : index
    %c0_8 = arith.constant 0 : index
    %c0_9 = arith.constant 0 : index
    %27 = vector.load %arg1[%c0_7, %c0_8, %c0_9] : memref<4x1x8xf32, #tpu.memory_space<vmem>>, vector<4x1x8xf32>
    %c0_10 = arith.constant 0 : index
    %c0_11 = arith.constant 0 : index
    %c0_12 = arith.constant 0 : index
    %28 = vector.load %arg3[%c0_10, %c0_11, %c0_12] : memref<2x8x128xf32, #tpu.memory_space<vmem>>, vector<1x8x128xf32>
    %29 = vector.shape_cast %28 : vector<1x8x128xf32> to vector<8x128xf32>
    %30 = vector.extract_strided_slice %29 {offsets = [0, 0], sizes = [1, 96], strides = [1, 1]} : vector<8x128xf32> to vector<1x96xf32>
    %31 = vector.extract_strided_slice %29 {offsets = [1, 0], sizes = [1, 32], strides = [1, 1]} : vector<8x128xf32> to vector<1x32xf32>
    %32 = vector.extract_strided_slice %29 {offsets = [2, 0], sizes = [1, 32], strides = [1, 1]} : vector<8x128xf32> to vector<1x32xf32>
    %33 = vector.extract_strided_slice %29 {offsets = [3, 0], sizes = [1, 32], strides = [1, 1]} : vector<8x128xf32> to vector<1x32xf32>
    %34 = vector.extract_strided_slice %29 {offsets = [4, 0], sizes = [1, 64], strides = [1, 1]} : vector<8x128xf32> to vector<1x64xf32>
    %35 = vector.extract_strided_slice %29 {offsets = [5, 0], sizes = [1, 32], strides = [1, 1]} : vector<8x128xf32> to vector<1x32xf32>
    %36 = vector.extract_strided_slice %29 {offsets = [6, 0], sizes = [1, 32], strides = [1, 1]} : vector<8x128xf32> to vector<1x32xf32>
    %37 = vector.extract_strided_slice %29 {offsets = [7, 0], sizes = [1, 32], strides = [1, 1]} : vector<8x128xf32> to vector<1x32xf32>
    %38 = arith.truncf %26 : vector<16x32xf32> to vector<16x32xbf16>
    %c0_13 = arith.constant 0 : index
    %c0_14 = arith.constant 0 : index
    %c0_15 = arith.constant 0 : index
    %39 = vector.load %arg4[%c0_13, %c0_14, %c0_15] : memref<2x32x96xbf16, #tpu.memory_space<vmem>>, vector<1x32x96xbf16>
    %40 = vector.shape_cast %39 : vector<1x32x96xbf16> to vector<32x96xbf16>
    %cst_16 = arith.constant dense<0.000000e+00> : vector<16x96xf32>
    %41 = tpu.matmul %38, %40, %cst_16 {dimension_numbers = #tpu.dot_dimension_numbers<[1], [0], [0], [1], [0, 0, 1, 1], [], []>} : vector<16x32xbf16>, vector<32x96xbf16>, vector<16x96xf32> -> vector<16x96xf32>
    %42 = vector.broadcast %30 : vector<1x96xf32> to vector<16x96xf32>
    %43 = arith.addf %41, %42 : vector<16x96xf32>
    %44 = vector.extract_strided_slice %43 {offsets = [0, 0], sizes = [16, 32], strides = [1, 1]} : vector<16x96xf32> to vector<16x32xf32>
    %45 = vector.extract_strided_slice %43 {offsets = [0, 32], sizes = [16, 32], strides = [1, 1]} : vector<16x96xf32> to vector<16x32xf32>
    %46 = vector.extract_strided_slice %43 {offsets = [0, 64], sizes = [16, 32], strides = [1, 1]} : vector<16x96xf32> to vector<16x32xf32>
    %47 = vector.extract_strided_slice %44 {offsets = [0, 0], sizes = [16, 16], strides = [1, 1]} : vector<16x32xf32> to vector<16x16xf32>
    %48 = vector.shape_cast %47 : vector<16x16xf32> to vector<2x8x16xf32>
    %49 = vector.extract_strided_slice %44 {offsets = [0, 16], sizes = [16, 16], strides = [1, 1]} : vector<16x32xf32> to vector<16x16xf32>
    %50 = vector.shape_cast %49 : vector<16x16xf32> to vector<2x8x16xf32>
    %51 = tpu.concatenate %48, %50 in 0 : vector<2x8x16xf32>, vector<2x8x16xf32> -> vector<4x8x16xf32>
    %52 = vector.extract_strided_slice %45 {offsets = [0, 0], sizes = [16, 16], strides = [1, 1]} : vector<16x32xf32> to vector<16x16xf32>
    %53 = vector.shape_cast %52 : vector<16x16xf32> to vector<2x8x16xf32>
    %54 = vector.extract_strided_slice %45 {offsets = [0, 16], sizes = [16, 16], strides = [1, 1]} : vector<16x32xf32> to vector<16x16xf32>
    %55 = vector.shape_cast %54 : vector<16x16xf32> to vector<2x8x16xf32>
    %56 = tpu.concatenate %53, %55 in 0 : vector<2x8x16xf32>, vector<2x8x16xf32> -> vector<4x8x16xf32>
    %57 = vector.extract_strided_slice %46 {offsets = [0, 0], sizes = [16, 16], strides = [1, 1]} : vector<16x32xf32> to vector<16x16xf32>
    %58 = vector.shape_cast %57 : vector<16x16xf32> to vector<2x8x16xf32>
    %59 = vector.extract_strided_slice %46 {offsets = [0, 16], sizes = [16, 16], strides = [1, 1]} : vector<16x32xf32> to vector<16x16xf32>
    %60 = vector.shape_cast %59 : vector<16x16xf32> to vector<2x8x16xf32>
    %61 = tpu.concatenate %58, %60 in 0 : vector<2x8x16xf32>, vector<2x8x16xf32> -> vector<4x8x16xf32>
    %62 = arith.truncf %51 : vector<4x8x16xf32> to vector<4x8x16xbf16>
    %63 = arith.truncf %56 : vector<4x8x16xf32> to vector<4x8x16xbf16>
    "tpu.trace_start"() <{level = 10 : i32, message = "gqd,gkd->gqk"}> : () -> ()
    %cst_17 = arith.constant dense<0.000000e+00> : vector<4x8x8xf32>
    %64 = tpu.matmul %62, %63, %cst_17 {dimension_numbers = #tpu.dot_dimension_numbers<[2], [2], [1], [1], [0, 0, 0, 1, 1, 1], [0], [0]>} : vector<4x8x16xbf16>, vector<4x8x16xbf16>, vector<4x8x8xf32> -> vector<4x8x8xf32>
    "tpu.trace_stop"() : () -> ()
    %65 = vector.broadcast %27 : vector<4x1x8xf32> to vector<4x8x8xf32>
    %66 = arith.addf %64, %65 : vector<4x8x8xf32>
    %cst_18 = arith.constant dense<0xFF800000> : vector<4x8xf32>
    %67 = vector.multi_reduction <maximumf>, %66, %cst_18 [2] : vector<4x8x8xf32> to vector<4x8xf32>
    %68 = vector.shape_cast %67 : vector<4x8xf32> to vector<4x8x1xf32>
    %69 = vector.broadcast %68 : vector<4x8x1xf32> to vector<4x8x8xf32>
    %70 = arith.subf %66, %69 : vector<4x8x8xf32>
    %71 = math.exp %70 : vector<4x8x8xf32>
    %cst_19 = arith.constant dense<0.000000e+00> : vector<4x8xf32>
    %72 = vector.multi_reduction <add>, %71, %cst_19 [2] : vector<4x8x8xf32> to vector<4x8xf32>
    %73 = vector.shape_cast %72 : vector<4x8xf32> to vector<4x8x1xf32>
    %74 = tpu.reciprocal %73 {approx = true} : vector<4x8x1xf32> -> vector<4x8x1xf32>
    %75 = vector.broadcast %74 : vector<4x8x1xf32> to vector<4x8x8xf32>
    %76 = arith.mulf %71, %75 : vector<4x8x8xf32>
    %77 = arith.truncf %76 : vector<4x8x8xf32> to vector<4x8x8xbf16>
    %78 = arith.truncf %61 : vector<4x8x16xf32> to vector<4x8x16xbf16>
    "tpu.trace_start"() <{level = 10 : i32, message = "gqk,gkd->gqd"}> : () -> ()
    %cst_20 = arith.constant dense<0.000000e+00> : vector<4x8x16xf32>
    %79 = tpu.matmul %77, %78, %cst_20 {dimension_numbers = #tpu.dot_dimension_numbers<[2], [1], [1], [2], [0, 0, 0, 1, 1, 2], [0], [0]>} : vector<4x8x8xbf16>, vector<4x8x16xbf16>, vector<4x8x16xf32> -> vector<4x8x16xf32>
    "tpu.trace_stop"() : () -> ()
    %80 = vector.extract_strided_slice %79 {offsets = [0, 0, 0], sizes = [2, 8, 16], strides = [1, 1, 1]} : vector<4x8x16xf32> to vector<2x8x16xf32>
    %81 = vector.shape_cast %80 : vector<2x8x16xf32> to vector<16x16xf32>
    %82 = vector.extract_strided_slice %79 {offsets = [2, 0, 0], sizes = [2, 8, 16], strides = [1, 1, 1]} : vector<4x8x16xf32> to vector<2x8x16xf32>
    %83 = vector.shape_cast %82 : vector<2x8x16xf32> to vector<16x16xf32>
    %84 = tpu.concatenate %81, %83 in 1 : vector<16x16xf32>, vector<16x16xf32> -> vector<16x32xf32>
    %85 = arith.truncf %84 : vector<16x32xf32> to vector<16x32xbf16>
    %c0_21 = arith.constant 0 : index
    %c0_22 = arith.constant 0 : index
    %c0_23 = arith.constant 0 : index
    %86 = vector.load %arg5[%c0_21, %c0_22, %c0_23] : memref<2x32x32xbf16, #tpu.memory_space<vmem>>, vector<1x32x32xbf16>
    %87 = vector.shape_cast %86 : vector<1x32x32xbf16> to vector<32x32xbf16>
    %cst_24 = arith.constant dense<0.000000e+00> : vector<16x32xf32>
    %88 = tpu.matmul %85, %87, %cst_24 {dimension_numbers = #tpu.dot_dimension_numbers<[1], [0], [0], [1], [0, 0, 1, 1], [], []>} : vector<16x32xbf16>, vector<32x32xbf16>, vector<16x32xf32> -> vector<16x32xf32>
    %89 = vector.broadcast %31 : vector<1x32xf32> to vector<16x32xf32>
    %90 = arith.addf %88, %89 : vector<16x32xf32>
    %91 = arith.addf %26, %90 : vector<16x32xf32>
    %cst_25 = arith.constant dense<0.000000e+00> : vector<16xf32>
    %92 = vector.multi_reduction <add>, %91, %cst_25 [1] : vector<16x32xf32> to vector<16xf32>
    %93 = vector.shape_cast %92 : vector<16xf32> to vector<16x1xf32>
    %cst_26 = arith.constant 3.200000e+01 : f32
    %94 = vector.broadcast %cst_26 : f32 to vector<16x1xf32>
    %95 = arith.divf %93, %94 : vector<16x1xf32>
    %96 = vector.broadcast %95 : vector<16x1xf32> to vector<16x32xf32>
    %97 = arith.subf %91, %96 : vector<16x32xf32>
    %98 = arith.mulf %97, %97 : vector<16x32xf32>
    %cst_27 = arith.constant dense<0.000000e+00> : vector<16xf32>
    %99 = vector.multi_reduction <add>, %98, %cst_27 [1] : vector<16x32xf32> to vector<16xf32>
    %100 = vector.shape_cast %99 : vector<16xf32> to vector<16x1xf32>
    %cst_28 = arith.constant 3.200000e+01 : f32
    %101 = vector.broadcast %cst_28 : f32 to vector<16x1xf32>
    %102 = arith.divf %100, %101 : vector<16x1xf32>
    %103 = vector.broadcast %95 : vector<16x1xf32> to vector<16x32xf32>
    %104 = arith.subf %91, %103 : vector<16x32xf32>
    %cst_29 = arith.constant 9.99999996E-13 : f32
    %105 = vector.broadcast %cst_29 : f32 to vector<16x1xf32>
    %106 = arith.addf %102, %105 : vector<16x1xf32>
    %107 = math.rsqrt %106 : vector<16x1xf32>
    %108 = vector.broadcast %107 : vector<16x1xf32> to vector<16x32xf32>
    %109 = arith.mulf %104, %108 : vector<16x32xf32>
    %110 = vector.broadcast %32 : vector<1x32xf32> to vector<16x32xf32>
    %111 = arith.mulf %109, %110 : vector<16x32xf32>
    %112 = vector.broadcast %33 : vector<1x32xf32> to vector<16x32xf32>
    %113 = arith.addf %111, %112 : vector<16x32xf32>
    %114 = arith.truncf %113 : vector<16x32xf32> to vector<16x32xbf16>
    %c0_30 = arith.constant 0 : index
    %c0_31 = arith.constant 0 : index
    %c0_32 = arith.constant 0 : index
    %115 = vector.load %arg6[%c0_30, %c0_31, %c0_32] : memref<2x32x64xbf16, #tpu.memory_space<vmem>>, vector<1x32x64xbf16>
    %116 = vector.shape_cast %115 : vector<1x32x64xbf16> to vector<32x64xbf16>
    %cst_33 = arith.constant dense<0.000000e+00> : vector<16x64xf32>
    %117 = tpu.matmul %114, %116, %cst_33 {dimension_numbers = #tpu.dot_dimension_numbers<[1], [0], [0], [1], [0, 0, 1, 1], [], []>} : vector<16x32xbf16>, vector<32x64xbf16>, vector<16x64xf32> -> vector<16x64xf32>
    %118 = vector.broadcast %34 : vector<1x64xf32> to vector<16x64xf32>
    %119 = arith.addf %117, %118 : vector<16x64xf32>
    %cst_34 = arith.constant 5.000000e-01 : f32
    %120 = vector.broadcast %cst_34 : f32 to vector<16x64xf32>
    %121 = arith.mulf %120, %119 : vector<16x64xf32>
    %cst_35 = arith.constant 4.471500e-02 : f32
    %122 = vector.broadcast %cst_35 : f32 to vector<16x64xf32>
    %123 = arith.mulf %122, %119 : vector<16x64xf32>
    %124 = arith.mulf %123, %119 : vector<16x64xf32>
    %125 = arith.mulf %124, %119 : vector<16x64xf32>
    %126 = arith.addf %119, %125 : vector<16x64xf32>
    %cst_36 = arith.constant 0.797884583 : f32
    %127 = vector.broadcast %cst_36 : f32 to vector<16x64xf32>
    %128 = arith.mulf %127, %126 : vector<16x64xf32>
    %129 = math.tanh %128 : vector<16x64xf32>
    %cst_37 = arith.constant 1.000000e+00 : f32
    %130 = vector.broadcast %cst_37 : f32 to vector<16x64xf32>
    %131 = arith.addf %130, %129 : vector<16x64xf32>
    %132 = arith.mulf %121, %131 : vector<16x64xf32>
    %133 = arith.truncf %132 : vector<16x64xf32> to vector<16x64xbf16>
    %c0_38 = arith.constant 0 : index
    %c0_39 = arith.constant 0 : index
    %c0_40 = arith.constant 0 : index
    %134 = vector.load %arg7[%c0_38, %c0_39, %c0_40] : memref<2x64x32xbf16, #tpu.memory_space<vmem>>, vector<1x64x32xbf16>
    %135 = vector.shape_cast %134 : vector<1x64x32xbf16> to vector<64x32xbf16>
    %cst_41 = arith.constant dense<0.000000e+00> : vector<16x32xf32>
    %136 = tpu.matmul %133, %135, %cst_41 {dimension_numbers = #tpu.dot_dimension_numbers<[1], [0], [0], [1], [0, 0, 1, 1], [], []>} : vector<16x64xbf16>, vector<64x32xbf16>, vector<16x32xf32> -> vector<16x32xf32>
    %137 = vector.broadcast %35 : vector<1x32xf32> to vector<16x32xf32>
    %138 = arith.addf %136, %137 : vector<16x32xf32>
    %139 = arith.addf %113, %138 : vector<16x32xf32>
    %cst_42 = arith.constant dense<0.000000e+00> : vector<16xf32>
    %140 = vector.multi_reduction <add>, %139, %cst_42 [1] : vector<16x32xf32> to vector<16xf32>
    %141 = vector.shape_cast %140 : vector<16xf32> to vector<16x1xf32>
    %cst_43 = arith.constant 3.200000e+01 : f32
    %142 = vector.broadcast %cst_43 : f32 to vector<16x1xf32>
    %143 = arith.divf %141, %142 : vector<16x1xf32>
    %144 = vector.broadcast %143 : vector<16x1xf32> to vector<16x32xf32>
    %145 = arith.subf %139, %144 : vector<16x32xf32>
    %146 = arith.mulf %145, %145 : vector<16x32xf32>
    %cst_44 = arith.constant dense<0.000000e+00> : vector<16xf32>
    %147 = vector.multi_reduction <add>, %146, %cst_44 [1] : vector<16x32xf32> to vector<16xf32>
    %148 = vector.shape_cast %147 : vector<16xf32> to vector<16x1xf32>
    %cst_45 = arith.constant 3.200000e+01 : f32
    %149 = vector.broadcast %cst_45 : f32 to vector<16x1xf32>
    %150 = arith.divf %148, %149 : vector<16x1xf32>
    %151 = vector.broadcast %143 : vector<16x1xf32> to vector<16x32xf32>
    %152 = arith.subf %139, %151 : vector<16x32xf32>
    %cst_46 = arith.constant 9.99999996E-13 : f32
    %153 = vector.broadcast %cst_46 : f32 to vector<16x1xf32>
    %154 = arith.addf %150, %153 : vector<16x1xf32>
    %155 = math.rsqrt %154 : vector<16x1xf32>
    %156 = vector.broadcast %155 : vector<16x1xf32> to vector<16x32xf32>
    %157 = arith.mulf %152, %156 : vector<16x32xf32>
    %158 = vector.broadcast %36 : vector<1x32xf32> to vector<16x32xf32>
    %159 = arith.mulf %157, %158 : vector<16x32xf32>
    %160 = vector.broadcast %37 : vector<1x32xf32> to vector<16x32xf32>
    %161 = arith.addf %159, %160 : vector<16x32xf32>
    %c1 = arith.constant 1 : index
    %c0_47 = arith.constant 0 : index
    %c0_48 = arith.constant 0 : index
    %162 = vector.load %arg3[%c1, %c0_47, %c0_48] : memref<2x8x128xf32, #tpu.memory_space<vmem>>, vector<1x8x128xf32>
    %163 = vector.shape_cast %162 : vector<1x8x128xf32> to vector<8x128xf32>
    %164 = vector.extract_strided_slice %163 {offsets = [0, 0], sizes = [1, 96], strides = [1, 1]} : vector<8x128xf32> to vector<1x96xf32>
    %165 = vector.extract_strided_slice %163 {offsets = [1, 0], sizes = [1, 32], strides = [1, 1]} : vector<8x128xf32> to vector<1x32xf32>
    %166 = vector.extract_strided_slice %163 {offsets = [2, 0], sizes = [1, 32], strides = [1, 1]} : vector<8x128xf32> to vector<1x32xf32>
    %167 = vector.extract_strided_slice %163 {offsets = [3, 0], sizes = [1, 32], strides = [1, 1]} : vector<8x128xf32> to vector<1x32xf32>
    %168 = vector.extract_strided_slice %163 {offsets = [4, 0], sizes = [1, 64], strides = [1, 1]} : vector<8x128xf32> to vector<1x64xf32>
    %169 = vector.extract_strided_slice %163 {offsets = [5, 0], sizes = [1, 32], strides = [1, 1]} : vector<8x128xf32> to vector<1x32xf32>
    %170 = vector.extract_strided_slice %163 {offsets = [6, 0], sizes = [1, 32], strides = [1, 1]} : vector<8x128xf32> to vector<1x32xf32>
    %171 = vector.extract_strided_slice %163 {offsets = [7, 0], sizes = [1, 32], strides = [1, 1]} : vector<8x128xf32> to vector<1x32xf32>
    %172 = arith.truncf %161 : vector<16x32xf32> to vector<16x32xbf16>
    %c1_49 = arith.constant 1 : index
    %c0_50 = arith.constant 0 : index
    %c0_51 = arith.constant 0 : index
    %173 = vector.load %arg4[%c1_49, %c0_50, %c0_51] : memref<2x32x96xbf16, #tpu.memory_space<vmem>>, vector<1x32x96xbf16>
    %174 = vector.shape_cast %173 : vector<1x32x96xbf16> to vector<32x96xbf16>
    %cst_52 = arith.constant dense<0.000000e+00> : vector<16x96xf32>
    %175 = tpu.matmul %172, %174, %cst_52 {dimension_numbers = #tpu.dot_dimension_numbers<[1], [0], [0], [1], [0, 0, 1, 1], [], []>} : vector<16x32xbf16>, vector<32x96xbf16>, vector<16x96xf32> -> vector<16x96xf32>
    %176 = vector.broadcast %164 : vector<1x96xf32> to vector<16x96xf32>
    %177 = arith.addf %175, %176 : vector<16x96xf32>
    %178 = vector.extract_strided_slice %177 {offsets = [0, 0], sizes = [16, 32], strides = [1, 1]} : vector<16x96xf32> to vector<16x32xf32>
    %179 = vector.extract_strided_slice %177 {offsets = [0, 32], sizes = [16, 32], strides = [1, 1]} : vector<16x96xf32> to vector<16x32xf32>
    %180 = vector.extract_strided_slice %177 {offsets = [0, 64], sizes = [16, 32], strides = [1, 1]} : vector<16x96xf32> to vector<16x32xf32>
    %181 = vector.extract_strided_slice %178 {offsets = [0, 0], sizes = [16, 16], strides = [1, 1]} : vector<16x32xf32> to vector<16x16xf32>
    %182 = vector.shape_cast %181 : vector<16x16xf32> to vector<2x8x16xf32>
    %183 = vector.extract_strided_slice %178 {offsets = [0, 16], sizes = [16, 16], strides = [1, 1]} : vector<16x32xf32> to vector<16x16xf32>
    %184 = vector.shape_cast %183 : vector<16x16xf32> to vector<2x8x16xf32>
    %185 = tpu.concatenate %182, %184 in 0 : vector<2x8x16xf32>, vector<2x8x16xf32> -> vector<4x8x16xf32>
    %186 = vector.extract_strided_slice %179 {offsets = [0, 0], sizes = [16, 16], strides = [1, 1]} : vector<16x32xf32> to vector<16x16xf32>
    %187 = vector.shape_cast %186 : vector<16x16xf32> to vector<2x8x16xf32>
    %188 = vector.extract_strided_slice %179 {offsets = [0, 16], sizes = [16, 16], strides = [1, 1]} : vector<16x32xf32> to vector<16x16xf32>
    %189 = vector.shape_cast %188 : vector<16x16xf32> to vector<2x8x16xf32>
    %190 = tpu.concatenate %187, %189 in 0 : vector<2x8x16xf32>, vector<2x8x16xf32> -> vector<4x8x16xf32>
    %191 = vector.extract_strided_slice %180 {offsets = [0, 0], sizes = [16, 16], strides = [1, 1]} : vector<16x32xf32> to vector<16x16xf32>
    %192 = vector.shape_cast %191 : vector<16x16xf32> to vector<2x8x16xf32>
    %193 = vector.extract_strided_slice %180 {offsets = [0, 16], sizes = [16, 16], strides = [1, 1]} : vector<16x32xf32> to vector<16x16xf32>
    %194 = vector.shape_cast %193 : vector<16x16xf32> to vector<2x8x16xf32>
    %195 = tpu.concatenate %192, %194 in 0 : vector<2x8x16xf32>, vector<2x8x16xf32> -> vector<4x8x16xf32>
    %196 = arith.truncf %185 : vector<4x8x16xf32> to vector<4x8x16xbf16>
    %197 = arith.truncf %190 : vector<4x8x16xf32> to vector<4x8x16xbf16>
    "tpu.trace_start"() <{level = 10 : i32, message = "gqd,gkd->gqk"}> : () -> ()
    %cst_53 = arith.constant dense<0.000000e+00> : vector<4x8x8xf32>
    %198 = tpu.matmul %196, %197, %cst_53 {dimension_numbers = #tpu.dot_dimension_numbers<[2], [2], [1], [1], [0, 0, 0, 1, 1, 1], [0], [0]>} : vector<4x8x16xbf16>, vector<4x8x16xbf16>, vector<4x8x8xf32> -> vector<4x8x8xf32>
    "tpu.trace_stop"() : () -> ()
    %199 = vector.broadcast %27 : vector<4x1x8xf32> to vector<4x8x8xf32>
    %200 = arith.addf %198, %199 : vector<4x8x8xf32>
    %cst_54 = arith.constant dense<0xFF800000> : vector<4x8xf32>
    %201 = vector.multi_reduction <maximumf>, %200, %cst_54 [2] : vector<4x8x8xf32> to vector<4x8xf32>
    %202 = vector.shape_cast %201 : vector<4x8xf32> to vector<4x8x1xf32>
    %203 = vector.broadcast %202 : vector<4x8x1xf32> to vector<4x8x8xf32>
    %204 = arith.subf %200, %203 : vector<4x8x8xf32>
    %205 = math.exp %204 : vector<4x8x8xf32>
    %cst_55 = arith.constant dense<0.000000e+00> : vector<4x8xf32>
    %206 = vector.multi_reduction <add>, %205, %cst_55 [2] : vector<4x8x8xf32> to vector<4x8xf32>
    %207 = vector.shape_cast %206 : vector<4x8xf32> to vector<4x8x1xf32>
    %208 = tpu.reciprocal %207 {approx = true} : vector<4x8x1xf32> -> vector<4x8x1xf32>
    %209 = vector.broadcast %208 : vector<4x8x1xf32> to vector<4x8x8xf32>
    %210 = arith.mulf %205, %209 : vector<4x8x8xf32>
    %211 = arith.truncf %210 : vector<4x8x8xf32> to vector<4x8x8xbf16>
    %212 = arith.truncf %195 : vector<4x8x16xf32> to vector<4x8x16xbf16>
    "tpu.trace_start"() <{level = 10 : i32, message = "gqk,gkd->gqd"}> : () -> ()
    %cst_56 = arith.constant dense<0.000000e+00> : vector<4x8x16xf32>
    %213 = tpu.matmul %211, %212, %cst_56 {dimension_numbers = #tpu.dot_dimension_numbers<[2], [1], [1], [2], [0, 0, 0, 1, 1, 2], [0], [0]>} : vector<4x8x8xbf16>, vector<4x8x16xbf16>, vector<4x8x16xf32> -> vector<4x8x16xf32>
    "tpu.trace_stop"() : () -> ()
    %214 = vector.extract_strided_slice %213 {offsets = [0, 0, 0], sizes = [2, 8, 16], strides = [1, 1, 1]} : vector<4x8x16xf32> to vector<2x8x16xf32>
    %215 = vector.shape_cast %214 : vector<2x8x16xf32> to vector<16x16xf32>
    %216 = vector.extract_strided_slice %213 {offsets = [2, 0, 0], sizes = [2, 8, 16], strides = [1, 1, 1]} : vector<4x8x16xf32> to vector<2x8x16xf32>
    %217 = vector.shape_cast %216 : vector<2x8x16xf32> to vector<16x16xf32>
    %218 = tpu.concatenate %215, %217 in 1 : vector<16x16xf32>, vector<16x16xf32> -> vector<16x32xf32>
    %219 = arith.truncf %218 : vector<16x32xf32> to vector<16x32xbf16>
    %c1_57 = arith.constant 1 : index
    %c0_58 = arith.constant 0 : index
    %c0_59 = arith.constant 0 : index
    %220 = vector.load %arg5[%c1_57, %c0_58, %c0_59] : memref<2x32x32xbf16, #tpu.memory_space<vmem>>, vector<1x32x32xbf16>
    %221 = vector.shape_cast %220 : vector<1x32x32xbf16> to vector<32x32xbf16>
    %cst_60 = arith.constant dense<0.000000e+00> : vector<16x32xf32>
    %222 = tpu.matmul %219, %221, %cst_60 {dimension_numbers = #tpu.dot_dimension_numbers<[1], [0], [0], [1], [0, 0, 1, 1], [], []>} : vector<16x32xbf16>, vector<32x32xbf16>, vector<16x32xf32> -> vector<16x32xf32>
    %223 = vector.broadcast %165 : vector<1x32xf32> to vector<16x32xf32>
    %224 = arith.addf %222, %223 : vector<16x32xf32>
    %225 = arith.addf %161, %224 : vector<16x32xf32>
    %cst_61 = arith.constant dense<0.000000e+00> : vector<16xf32>
    %226 = vector.multi_reduction <add>, %225, %cst_61 [1] : vector<16x32xf32> to vector<16xf32>
    %227 = vector.shape_cast %226 : vector<16xf32> to vector<16x1xf32>
    %cst_62 = arith.constant 3.200000e+01 : f32
    %228 = vector.broadcast %cst_62 : f32 to vector<16x1xf32>
    %229 = arith.divf %227, %228 : vector<16x1xf32>
    %230 = vector.broadcast %229 : vector<16x1xf32> to vector<16x32xf32>
    %231 = arith.subf %225, %230 : vector<16x32xf32>
    %232 = arith.mulf %231, %231 : vector<16x32xf32>
    %cst_63 = arith.constant dense<0.000000e+00> : vector<16xf32>
    %233 = vector.multi_reduction <add>, %232, %cst_63 [1] : vector<16x32xf32> to vector<16xf32>
    %234 = vector.shape_cast %233 : vector<16xf32> to vector<16x1xf32>
    %cst_64 = arith.constant 3.200000e+01 : f32
    %235 = vector.broadcast %cst_64 : f32 to vector<16x1xf32>
    %236 = arith.divf %234, %235 : vector<16x1xf32>
    %237 = vector.broadcast %229 : vector<16x1xf32> to vector<16x32xf32>
    %238 = arith.subf %225, %237 : vector<16x32xf32>
    %cst_65 = arith.constant 9.99999996E-13 : f32
    %239 = vector.broadcast %cst_65 : f32 to vector<16x1xf32>
    %240 = arith.addf %236, %239 : vector<16x1xf32>
    %241 = math.rsqrt %240 : vector<16x1xf32>
    %242 = vector.broadcast %241 : vector<16x1xf32> to vector<16x32xf32>
    %243 = arith.mulf %238, %242 : vector<16x32xf32>
    %244 = vector.broadcast %166 : vector<1x32xf32> to vector<16x32xf32>
    %245 = arith.mulf %243, %244 : vector<16x32xf32>
    %246 = vector.broadcast %167 : vector<1x32xf32> to vector<16x32xf32>
    %247 = arith.addf %245, %246 : vector<16x32xf32>
    %248 = arith.truncf %247 : vector<16x32xf32> to vector<16x32xbf16>
    %c1_66 = arith.constant 1 : index
    %c0_67 = arith.constant 0 : index
    %c0_68 = arith.constant 0 : index
    %249 = vector.load %arg6[%c1_66, %c0_67, %c0_68] : memref<2x32x64xbf16, #tpu.memory_space<vmem>>, vector<1x32x64xbf16>
    %250 = vector.shape_cast %249 : vector<1x32x64xbf16> to vector<32x64xbf16>
    %cst_69 = arith.constant dense<0.000000e+00> : vector<16x64xf32>
    %251 = tpu.matmul %248, %250, %cst_69 {dimension_numbers = #tpu.dot_dimension_numbers<[1], [0], [0], [1], [0, 0, 1, 1], [], []>} : vector<16x32xbf16>, vector<32x64xbf16>, vector<16x64xf32> -> vector<16x64xf32>
    %252 = vector.broadcast %168 : vector<1x64xf32> to vector<16x64xf32>
    %253 = arith.addf %251, %252 : vector<16x64xf32>
    %cst_70 = arith.constant 5.000000e-01 : f32
    %254 = vector.broadcast %cst_70 : f32 to vector<16x64xf32>
    %255 = arith.mulf %254, %253 : vector<16x64xf32>
    %cst_71 = arith.constant 4.471500e-02 : f32
    %256 = vector.broadcast %cst_71 : f32 to vector<16x64xf32>
    %257 = arith.mulf %256, %253 : vector<16x64xf32>
    %258 = arith.mulf %257, %253 : vector<16x64xf32>
    %259 = arith.mulf %258, %253 : vector<16x64xf32>
    %260 = arith.addf %253, %259 : vector<16x64xf32>
    %cst_72 = arith.constant 0.797884583 : f32
    %261 = vector.broadcast %cst_72 : f32 to vector<16x64xf32>
    %262 = arith.mulf %261, %260 : vector<16x64xf32>
    %263 = math.tanh %262 : vector<16x64xf32>
    %cst_73 = arith.constant 1.000000e+00 : f32
    %264 = vector.broadcast %cst_73 : f32 to vector<16x64xf32>
    %265 = arith.addf %264, %263 : vector<16x64xf32>
    %266 = arith.mulf %255, %265 : vector<16x64xf32>
    %267 = arith.truncf %266 : vector<16x64xf32> to vector<16x64xbf16>
    %c1_74 = arith.constant 1 : index
    %c0_75 = arith.constant 0 : index
    %c0_76 = arith.constant 0 : index
    %268 = vector.load %arg7[%c1_74, %c0_75, %c0_76] : memref<2x64x32xbf16, #tpu.memory_space<vmem>>, vector<1x64x32xbf16>
    %269 = vector.shape_cast %268 : vector<1x64x32xbf16> to vector<64x32xbf16>
    %cst_77 = arith.constant dense<0.000000e+00> : vector<16x32xf32>
    %270 = tpu.matmul %267, %269, %cst_77 {dimension_numbers = #tpu.dot_dimension_numbers<[1], [0], [0], [1], [0, 0, 1, 1], [], []>} : vector<16x64xbf16>, vector<64x32xbf16>, vector<16x32xf32> -> vector<16x32xf32>
    %271 = vector.broadcast %169 : vector<1x32xf32> to vector<16x32xf32>
    %272 = arith.addf %270, %271 : vector<16x32xf32>
    %273 = arith.addf %247, %272 : vector<16x32xf32>
    %cst_78 = arith.constant dense<0.000000e+00> : vector<16xf32>
    %274 = vector.multi_reduction <add>, %273, %cst_78 [1] : vector<16x32xf32> to vector<16xf32>
    %275 = vector.shape_cast %274 : vector<16xf32> to vector<16x1xf32>
    %cst_79 = arith.constant 3.200000e+01 : f32
    %276 = vector.broadcast %cst_79 : f32 to vector<16x1xf32>
    %277 = arith.divf %275, %276 : vector<16x1xf32>
    %278 = vector.broadcast %277 : vector<16x1xf32> to vector<16x32xf32>
    %279 = arith.subf %273, %278 : vector<16x32xf32>
    %280 = arith.mulf %279, %279 : vector<16x32xf32>
    %cst_80 = arith.constant dense<0.000000e+00> : vector<16xf32>
    %281 = vector.multi_reduction <add>, %280, %cst_80 [1] : vector<16x32xf32> to vector<16xf32>
    %282 = vector.shape_cast %281 : vector<16xf32> to vector<16x1xf32>
    %cst_81 = arith.constant 3.200000e+01 : f32
    %283 = vector.broadcast %cst_81 : f32 to vector<16x1xf32>
    %284 = arith.divf %282, %283 : vector<16x1xf32>
    %285 = vector.broadcast %277 : vector<16x1xf32> to vector<16x32xf32>
    %286 = arith.subf %273, %285 : vector<16x32xf32>
    %cst_82 = arith.constant 9.99999996E-13 : f32
    %287 = vector.broadcast %cst_82 : f32 to vector<16x1xf32>
    %288 = arith.addf %284, %287 : vector<16x1xf32>
    %289 = math.rsqrt %288 : vector<16x1xf32>
    %290 = vector.broadcast %289 : vector<16x1xf32> to vector<16x32xf32>
    %291 = arith.mulf %286, %290 : vector<16x32xf32>
    %292 = vector.broadcast %170 : vector<1x32xf32> to vector<16x32xf32>
    %293 = arith.mulf %291, %292 : vector<16x32xf32>
    %294 = vector.broadcast %171 : vector<1x32xf32> to vector<16x32xf32>
    %295 = arith.addf %293, %294 : vector<16x32xf32>
    %296 = arith.truncf %295 : vector<16x32xf32> to vector<16x32xbf16>
    %c0_83 = arith.constant 0 : index
    %c0_84 = arith.constant 0 : index
    %297 = vector.load %arg8[%c0_83, %c0_84] : memref<32x128xbf16, #tpu.memory_space<vmem>>, vector<32x128xbf16>
    %cst_85 = arith.constant dense<0.000000e+00> : vector<16x128xf32>
    %298 = tpu.matmul %296, %297, %cst_85 {dimension_numbers = #tpu.dot_dimension_numbers<[1], [0], [0], [1], [0, 0, 1, 1], [], []>} : vector<16x32xbf16>, vector<32x128xbf16>, vector<16x128xf32> -> vector<16x128xf32>
    %299 = vector.broadcast %3 : vector<1x128xf32> to vector<16x128xf32>
    %300 = arith.addf %298, %299 : vector<16x128xf32>
    %c0_86 = arith.constant 0 : index
    %c0_87 = arith.constant 0 : index
    %301 = vector.load %arg9[%c0_86, %c0_87] : memref<16x128xf32, #tpu.memory_space<vmem>>, vector<16x128xf32>
    tpu.vector_store %arg9[%c0_86, %c0_87], %300 {strides = array<i32>} : memref<16x128xf32, #tpu.memory_space<vmem>>, vector<16x128xf32>,
    return
  }
}

</mosaic_0001>

<llo_original>
// kernel: text_encoder_forward.1
$region0: #{text_encoder_forward.1}
  #allocation0 [shape = 'u32[]', space=smem, size = 0x4, offset = 0x4, fixed_abs, tag = 'smem constant byte address 0x4 - core index']
  #allocation1 [shape = 'u32[144,128]{1,0:T(1,128)}', space=vmem, size = 0x12000, scoped, tag = 'internal scratch']
  %s0 = inlined_call_operand.hbm [shape: f32[16,32], index: 0, kind: input, shape index: {}]
  %s1 = inlined_call_operand.hbm [shape: f32[4,1,8], index: 1, kind: input, shape index: {}]
  %s2 = inlined_call_operand.hbm [shape: f32[8,128], index: 2, kind: input, shape index: {}]
  %s3 = inlined_call_operand.hbm [shape: f32[2,8,128], index: 3, kind: input, shape index: {}]
  %s4 = inlined_call_operand.hbm [shape: bf16[2,32,96], index: 4, kind: input, shape index: {}]
  %s5 = inlined_call_operand.hbm [shape: bf16[2,32,32], index: 5, kind: input, shape index: {}]
  %s6 = inlined_call_operand.hbm [shape: bf16[2,32,64], index: 6, kind: input, shape index: {}]
  %s7 = inlined_call_operand.hbm [shape: bf16[2,64,32], index: 7, kind: input, shape index: {}]
  %s8 = inlined_call_operand.hbm [shape: bf16[32,128], index: 8, kind: input, shape index: {}]
  %s9 = inlined_call_operand.hbm [shape: f32[16,128], index: 9, kind: output, shape index: {}]
  %s10 = sld [smem:[#allocation0]]
  $region82: #{text_encoder_forward.1} parent=0
    _
  %s12 = ssub.s32 1, %s10
  %s13 = scalar_select 0, %s12, %s10
  $region1: #{text_encoder_forward.1} parent=0
    #allocation2 [shape = 'u8[8192]{0}', space=vmem, size = 0x2000, scoped, tag = 'input window, operand 0, single buffered']
    #allocation3 [shape = 's32[1]{0}', space=sflag, size = 0x4, scoped, tag = 'scoped memory for text_encoder_forward.1']
    #allocation4 [shape = 's32[1]{0}', space=sflag, size = 0x4, scoped, tag = 'scoped memory for text_encoder_forward.1']
    #allocation5 [shape = 'u8[2048]{0}', space=vmem, size = 0x800, scoped, tag = 'input window, operand 1, single buffered']
    #allocation6 [shape = 's32[1]{0}', space=sflag, size = 0x4, scoped, tag = 'scoped memory for text_encoder_forward.1']
    #allocation7 [shape = 'u8[4096]{0}', space=vmem, size = 0x1000, scoped, tag = 'input window, operand 2, single buffered']
    #allocation8 [shape = 'u8[8192]{0}', space=vmem, size = 0x2000, scoped, tag = 'input window, operand 3, single buffered']
    #allocation9 [shape = 's32[1]{0}', space=sflag, size = 0x4, scoped, tag = 'scoped memory for text_encoder_forward.1']
    #allocation10 [shape = 'u8[16384]{0}', space=vmem, size = 0x4000, scoped, tag = 'input window, operand 4, single buffered']
    #allocation11 [shape = 'u8[16384]{0}', space=vmem, size = 0x4000, scoped, tag = 'input window, operand 5, single buffered']
    #allocation12 [shape = 's32[1]{0}', space=sflag, size = 0x4, scoped, tag = 'scoped memory for text_encoder_forward.1']
    #allocation13 [shape = 'u8[16384]{0}', space=vmem, size = 0x4000, scoped, tag = 'input window, operand 6, single buffered']
    #allocation14 [shape = 'u8[32768]{0}', space=vmem, size = 0x8000, scoped, tag = 'input window, operand 7, single buffered']
    #allocation15 [shape = 's32[1]{0}', space=sflag, size = 0x4, scoped, tag = 'scoped memory for text_encoder_forward.1']
    #allocation16 [shape = 'u8[8192]{0}', space=vmem, size = 0x2000, scoped, tag = 'input window, operand 8, single buffered']
    #allocation17 [shape = 'u8[8192]{0}', space=vmem, size = 0x2000, scoped, tag = 'output window, operand 0, single buffered']
    %14 = vsyncpa [#allocation3], 0
    %15 = vsyncpa [#allocation6], 0
    %16 = vsyncpa [#allocation9], 0
    %17 = vsyncpa [#allocation12], 0
    %18 = vsyncpa [#allocation15], 0
    %19 = vsyncpa [#allocation4], 0
    // Predicated region
    $region2: #{text_encoder_forward.1} parent=1 // pred_check
      _
    $region3: #{text_encoder_forward.1} parent=1 // pred_check_branch
      %21 = sbr.rel (0) target = $region5
    $region4: #{text_encoder_forward.1} parent=1 // pred_region
      %s23 = ssub.s32 256, 256
      %24 = vsyncadd [#allocation3], %s23
      %s25 = sshll.u32 [#allocation2], 4
      %s26 = int_to_ptr.vmem [resolvable:$true] %s25
      %31 = dma.hbm_to_vmem [thread:$0]  %s0, 256, %s26, [#allocation3], 128, 128, 8
    $region5: #{text_encoder_forward.1} parent=1 // pred_fallthru
      _
    // Predicated region
    $region6: #{text_encoder_forward.1} parent=1 // pred_check
      _
    $region7: #{text_encoder_forward.1} parent=1 // pred_check_branch
      %33 = sbr.rel (0) target = $region9
    $region8: #{text_encoder_forward.1} parent=1 // pred_region
      %s35 = ssub.s32 64, 64
      %36 = vsyncadd [#allocation6], %s35
      %s37 = sshll.u32 [#allocation5], 4
      %s38 = int_to_ptr.vmem [resolvable:$true] %s37
      %43 = dma.hbm_to_vmem [thread:$0]  %s1, 64, %s38, [#allocation6], 16, 16, 1
    $region9: #{text_encoder_forward.1} parent=1 // pred_fallthru
      _
    // Predicated region
    $region10: #{text_encoder_forward.1} parent=1 // pred_check
      _
    $region11: #{text_encoder_forward.1} parent=1 // pred_check_branch
      %45 = sbr.rel (0) target = $region13
    $region12: #{text_encoder_forward.1} parent=1 // pred_region
      %s47 = ssub.s32 128, 128
      %48 = vsyncadd [#allocation6], %s47
      %s50 = sshll.u32 [#allocation7], 4
      %s51 = int_to_ptr.vmem [resolvable:$true] %s50
      %53 = dma.hbm_to_vmem [thread:$0]  %s2, 128, %s51, [#allocation6]
    $region13: #{text_encoder_forward.1} parent=1 // pred_fallthru
      _
    // Predicated region
    $region14: #{text_encoder_forward.1} parent=1 // pred_check
      _
    $region15: #{text_encoder_forward.1} parent=1 // pred_check_branch
      %55 = sbr.rel (0) target = $region17
    $region16: #{text_encoder_forward.1} parent=1 // pred_region
      %s57 = ssub.s32 256, 256
      %58 = vsyncadd [#allocation9], %s57
      %s59 = sshll.u32 [#allocation8], 4
      %s60 = int_to_ptr.vmem [resolvable:$true] %s59
      %65 = dma.hbm_to_vmem [thread:$0]  %s3, 256, %s60, [#allocation9], 128, 128, 8
    $region17: #{text_encoder_forward.1} parent=1 // pred_fallthru
      _
    // Predicated region
    $region18: #{text_encoder_forward.1} parent=1 // pred_check
      _
    $region19: #{text_encoder_forward.1} parent=1 // pred_check_branch
      %67 = sbr.rel (0) target = $region21
    $region20: #{text_encoder_forward.1} parent=1 // pred_region
      %s69 = ssub.s32 512, 512
      %70 = vsyncadd [#allocation9], %s69
      %s71 = sshll.u32 [#allocation10], 4
      %s72 = int_to_ptr.vmem [resolvable:$true] %s71
      %77 = dma.hbm_to_vmem [thread:$0]  %s4, 512, %s72, [#allocation9], 64, 64, 4
    $region21: #{text_encoder_forward.1} parent=1 // pred_fallthru
      _
    // Predicated region
    $region22: #{text_encoder_forward.1} parent=1 // pred_check
      _
    $region23: #{text_encoder_forward.1} parent=1 // pred_check_branch
      %79 = sbr.rel (0) target = $region25
    $region24: #{text_encoder_forward.1} parent=1 // pred_region
      %s81 = ssub.s32 512, 512
      %82 = vsyncadd [#allocation12], %s81
      %s83 = sshll.u32 [#allocation11], 4
      %s84 = int_to_ptr.vmem [resolvable:$true] %s83
      %89 = dma.hbm_to_vmem [thread:$0]  %s5, 512, %s84, [#allocation12], 64, 64, 4
    $region25: #{text_encoder_forward.1} parent=1 // pred_fallthru
      _
    // Predicated region
    $region26: #{text_encoder_forward.1} parent=1 // pred_check
      _
    $region27: #{text_encoder_forward.1} parent=1 // pred_check_branch
      %91 = sbr.rel (0) target = $region29
    $region28: #{text_encoder_forward.1} parent=1 // pred_region
      %s93 = ssub.s32 512, 512
      %94 = vsyncadd [#allocation12], %s93
      %s95 = sshll.u32 [#allocation13], 4
      %s96 = int_to_ptr.vmem [resolvable:$true] %s95
      %101 = dma.hbm_to_vmem [thread:$0]  %s6, 512, %s96, [#allocation12], 64, 64, 4
    $region29: #{text_encoder_forward.1} parent=1 // pred_fallthru
      _
    // Predicated region
    $region30: #{text_encoder_forward.1} parent=1 // pred_check
      _
    $region31: #{text_encoder_forward.1} parent=1 // pred_check_branch
      %103 = sbr.rel (0) target = $region33
    $region32: #{text_encoder_forward.1} parent=1 // pred_region
      %s105 = ssub.s32 1024, 1024
      %106 = vsyncadd [#allocation15], %s105
      %s107 = sshll.u32 [#allocation14], 4
      %s108 = int_to_ptr.vmem [resolvable:$true] %s107
      %113 = dma.hbm_to_vmem [thread:$0]  %s7, 1024, %s108, [#allocation15], 64, 64, 4
    $region33: #{text_encoder_forward.1} parent=1 // pred_fallthru
      _
    // Predicated region
    $region34: #{text_encoder_forward.1} parent=1 // pred_check
      _
    $region35: #{text_encoder_forward.1} parent=1 // pred_check_branch
      %115 = sbr.rel (0) target = $region37
    $region36: #{text_encoder_forward.1} parent=1 // pred_region
      %s117 = ssub.s32 256, 256
      %118 = vsyncadd [#allocation15], %s117
      %s119 = sshll.u32 [#allocation16], 4
      %s120 = int_to_ptr.vmem [resolvable:$true] %s119
      %125 = dma.hbm_to_vmem [thread:$0]  %s8, 256, %s120, [#allocation15], 64, 64, 4
    $region37: #{text_encoder_forward.1} parent=1 // pred_fallthru
      _
    // Predicated region
    $region38: #{text_encoder_forward.1} parent=1 // pred_check
      _
    $region39: #{text_encoder_forward.1} parent=1 // pred_check_branch
      %127 = sbr.rel (0) target = $region41
    $region40: #{text_encoder_forward.1} parent=1 // pred_region
      %128 = dma.done [#allocation3], 256
    $region41: #{text_encoder_forward.1} parent=1 // pred_fallthru
      _
    // Predicated region
    $region42: #{text_encoder_forward.1} parent=1 // pred_check
      _
    $region43: #{text_encoder_forward.1} parent=1 // pred_check_branch
      %130 = sbr.rel (0) target = $region45
    $region44: #{text_encoder_forward.1} parent=1 // pred_region
      %131 = dma.done [#allocation6], 64
    $region45: #{text_encoder_forward.1} parent=1 // pred_fallthru
      _
    // Predicated region
    $region46: #{text_encoder_forward.1} parent=1 // pred_check
      _
    $region47: #{text_encoder_forward.1} parent=1 // pred_check_branch
      %133 = sbr.rel (0) target = $region49
    $region48: #{text_encoder_forward.1} parent=1 // pred_region
      %134 = dma.done [#allocation6], 128
    $region49: #{text_encoder_forward.1} parent=1 // pred_fallthru
      _
    // Predicated region
    $region50: #{text_encoder_forward.1} parent=1 // pred_check
      _
    $region51: #{text_encoder_forward.1} parent=1 // pred_check_branch
      %136 = sbr.rel (0) target = $region53
    $region52: #{text_encoder_forward.1} parent=1 // pred_region
      %137 = dma.done [#allocation9], 256
    $region53: #{text_encoder_forward.1} parent=1 // pred_fallthru
      _
    // Predicated region
    $region54: #{text_encoder_forward.1} parent=1 // pred_check
      _
    $region55: #{text_encoder_forward.1} parent=1 // pred_check_branch
      %139 = sbr.rel (0) target = $region57
    $region56: #{text_encoder_forward.1} parent=1 // pred_region
      %140 = dma.done [#allocation9], 512
    $region57: #{text_encoder_forward.1} parent=1 // pred_fallthru
      _
    // Predicated region
    $region58: #{text_encoder_forward.1} parent=1 // pred_check
      _
    $region59: #{text_encoder_forward.1} parent=1 // pred_check_branch
      %142 = sbr.rel (0) target = $region61
    $region60: #{text_encoder_forward.1} parent=1 // pred_region
      %143 = dma.done [#allocation12], 512
    $region61: #{text_encoder_forward.1} parent=1 // pred_fallthru
      _
    // Predicated region
    $region62: #{text_encoder_forward.1} parent=1 // pred_check
      _
    $region63: #{text_encoder_forward.1} parent=1 // pred_check_branch
      %145 = sbr.rel (0) target = $region65
    $region64: #{text_encoder_forward.1} parent=1 // pred_region
      %146 = dma.done [#allocation12], 512
    $region65: #{text_encoder_forward.1} parent=1 // pred_fallthru
      _
    // Predicated region
    $region66: #{text_encoder_forward.1} parent=1 // pred_check
      _
    $region67: #{text_encoder_forward.1} parent=1 // pred_check_branch
      %148 = sbr.rel (0) target = $region69
    $region68: #{text_encoder_forward.1} parent=1 // pred_region
      %149 = dma.done [#allocation15], 1024
    $region69: #{text_encoder_forward.1} parent=1 // pred_fallthru
      _
    // Predicated region
    $region70: #{text_encoder_forward.1} parent=1 // pred_check
      _
    $region71: #{text_encoder_forward.1} parent=1 // pred_check_branch
      %151 = sbr.rel (0) target = $region73
    $region72: #{text_encoder_forward.1} parent=1 // pred_region
      %152 = dma.done [#allocation15], 256
    $region73: #{text_encoder_forward.1} parent=1 // pred_fallthru
      _
    %v154 = vld [vmem:[#allocation7] sm:$0xff]
    %v155 = vld [vmem:[#allocation2] sm:$0xff]
    %v156 = vld [vmem:[#allocation2 + $0x8] sm:$0xff]
    %vm157 = vcmask 261120
    %v158 = vsel %vm157, %v155, 0.0
    %159 = vadd.xlane.f32.xlu0 %v158
    %v160 = vpop.xlane.xlu0 %159
    %v161 = vsel %vm157, %v156, 0.0
    %162 = vadd.xlane.f32.xlu0 %v161
    %v163 = vpop.xlane.xlu0 %162
    %v164 = vrcp.pop 32.0
    %v165 = vmul.f32 %v160, %v164
    %v166 = vmul.f32 %v163, %v164
    %v167 = vsub.f32 %v155, %v165
    %v168 = vsub.f32 %v156, %v166
    %v169 = vmul.f32 %v167, %v167
    %v170 = vmul.f32 %v168, %v168
    %v171 = vsel %vm157, %v169, 0.0
    %172 = vadd.xlane.f32.xlu0 %v171
    %v173 = vpop.xlane.xlu0 %172
    %v174 = vsel %vm157, %v170, 0.0
    %175 = vadd.xlane.f32.xlu0 %v174
    %v176 = vpop.xlane.xlu0 %175
    %v177 = vmul.f32 %v173, %v164
    %v178 = vmul.f32 %v176, %v164
    %v179 = vadd.f32 %v177, 1e-12
    %v180 = vadd.f32 %v178, 1e-12
    %v181 = vrsqrt.pop %v179
    %v182 = vrsqrt.pop %v180
    %v183 = vmul.f32 %v167, %v181
    %v184 = vmul.f32 %v168, %v182
    %v185 = vlaneseq
    %v186 = vshrl.u32 %v185, 7
    %v187 = vsub.s32 0, %v186
    %v188 = vrot.slane %v154, %v187
    %v189 = vmul.f32 %v183, %v188
    %v190 = vmul.f32 %v184, %v188
    %v191 = vlaneseq
    %v192 = vshrl.u32 %v191, 7
    %v193 = vsub.s32 1, %v192
    %v194 = vrot.slane %v154, %v193
    %v195 = vadd.f32 %v189, %v194
    %v196 = vadd.f32 %v190, %v194
    %v197 = vld [vmem:[#allocation5] sm:$0x1]
    %v198 = vld [vmem:[#allocation5 + $0x1] sm:$0x1]
    %v199 = vld [vmem:[#allocation5 + $0x2] sm:$0x1]
    %v200 = vld [vmem:[#allocation5 + $0x3] sm:$0x1]
    %v201 = vld [vmem:[#allocation8] sm:$0xff]
    %v202 = vpack.c.bf16 %v196, %v195
    %v203 = vld [vmem:[#allocation10] sm:$0xf]
    %v204 = vld [vmem:[#allocation10 + $0x4] sm:$0xf]
    %v205 = vld [vmem:[#allocation10 + $0x8] sm:$0xf]
    %v206 = vld [vmem:[#allocation10 + $0xc] sm:$0xf]
    %v207 = vlaneseq
    %v208 = vshrl.u32 %v207, 7
    %v209 = vsub.s32 0, %v208
    %v210 = vrot.slane %v201, %v209
    %v215 = vunpack.c.l.b16 %v203
    %v216 = vunpack.c.l.b16 %v204
    %v217 = vunpack.c.l.b16 %v205
    %v218 = vunpack.c.l.b16 %v206
    %v219 = vpack.c.b16 %v216, %v215
    %v220 = vpack.c.b16 %v218, %v217
    %v224 = vsel %vm157, %v202, 0
    %226 = vmatprep.subr.bf16.mxu0 0
    %227 = vmatpush1.bf16.msra.mxu0 %v219
    %228 = vmatprep.subr.bf16.mxu0 0
    %229 = vmatpush1.bf16.msra.mxu0 %v220
    %230 = vmatprep.subr.bf16.mxu0 0
    %231 = vmatpush1.bf16.msra.mxu0 0
    %232 = vmatprep.subr.bf16.mxu0 0
    %233 = vmatpush1.bf16.msra.mxu0 0
    %234 = vmatprep.subr.bf16.mxu0 0
    %235 = vmatpush1.bf16.msra.mxu0 0
    %236 = vmatprep.subr.bf16.mxu0 0
    %237 = vmatpush1.bf16.msra.mxu0 0
    %238 = vmatprep.subr.bf16.mxu0 0
    %239 = vmatpush1.bf16.msra.mxu0 0
    %240 = vmatprep.subr.bf16.mxu0 0
    %241 = vmatpush1.bf16.msra.mxu0 0
    %242 = vmatprep.subr.bf16.mxu0 0
    %243 = vmatpush1.bf16.msra.mxu0 0
    %244 = vmatprep.subr.bf16.mxu0 0
    %245 = vmatpush1.bf16.msra.mxu0 0
    %246 = vmatprep.subr.bf16.mxu0 0
    %247 = vmatpush1.bf16.msra.mxu0 0
    %248 = vmatprep.subr.bf16.mxu0 0
    %249 = vmatpush1.bf16.msra.mxu0 0
    %250 = vmatprep.subr.bf16.mxu0 0
    %251 = vmatpush1.bf16.msra.mxu0 0
    %252 = vmatprep.subr.bf16.mxu0 0
    %253 = vmatpush1.bf16.msra.mxu0 0
    %254 = vmatprep.subr.bf16.mxu0 0
    %255 = vmatpush1.bf16.msra.mxu0 0
    %256 = vmatprep.subr.bf16.mxu0 0
    %257 = vmatpush1.bf16.msra.mxu0 0
    %258 = vmatprep.mubr.bf16.mxu0 0
    %259 = vmatmul.mubr.bf16.gmra.mrb[0].mxu0 %v224
    %v260 = vpop.f32.mrb[0].mxu0
    %v261 = vadd.f32 %v210, %v260
    %v262 = vpop.f32.mrb[0].mxu0
    %v263 = vpop.f32.mrb[0].mxu0
    %v264 = vadd.f32 %v210, %v263
    %v265 = vpop.f32.mrb[0].mxu0
    %266 = vdwg.mxu0
    %269 = vrot.lane.b32.xlu0 %v261, 112
    %v270 = vpop.permute.xlu0 %269
    %271 = vrot.lane.b32.xlu0 %v264, 112
    %v272 = vpop.permute.xlu0 %271
    %v275 = vpack.c.bf16 %v261, %v261
    %v276 = vpack.c.bf16 %v264, %v264
    %v277 = vpack.c.bf16 %v270, %v270
    %v278 = vpack.c.bf16 %v272, %v272
    %v283 = vlaneseq
    %v284 = vshrl.u32 %v283, 7
    %v285 = vsub.s32 0, %v284
    %v286 = vrot.slane %v197, %v285
    %v287 = vlaneseq
    %v288 = vshrl.u32 %v287, 7
    %v289 = vsub.s32 0, %v288
    %v290 = vrot.slane %v198, %v289
    %v291 = vlaneseq
    %v292 = vshrl.u32 %v291, 7
    %v293 = vsub.s32 0, %v292
    %v294 = vrot.slane %v199, %v293
    %v295 = vlaneseq
    %v296 = vshrl.u32 %v295, 7
    %v297 = vsub.s32 0, %v296
    %v298 = vrot.slane %v200, %v297
    %304 = vrot.lane.b32.xlu0 %v275, 96
    %v305 = vpop.permute.xlu0 %304
    %vm306 = vcmask 130048
    %v308 = vsel %vm306, %v275, 0
    %v311 = vsel %vm306, %v305, 0
    %313 = vmatprep.subr.bf16.mxu0 0
    %314 = vmatpush1.bf16.xpose.msra.mxu0 %v311
    %315 = vmatprep.subr.bf16.mxu0 0
    %316 = vmatpush1.bf16.xpose.msra.mxu0 0
    %317 = vmatprep.subr.bf16.mxu0 0
    %318 = vmatpush1.bf16.xpose.msra.mxu0 0
    %319 = vmatprep.subr.bf16.mxu0 0
    %320 = vmatpush1.bf16.xpose.msra.mxu0 0
    %321 = vmatprep.subr.bf16.mxu0 0
    %322 = vmatpush1.bf16.xpose.msra.mxu0 0
    %323 = vmatprep.subr.bf16.mxu0 0
    %324 = vmatpush1.bf16.xpose.msra.mxu0 0
    %325 = vmatprep.subr.bf16.mxu0 0
    %326 = vmatpush1.bf16.xpose.msra.mxu0 0
    %327 = vmatprep.subr.bf16.mxu0 0
    %328 = vmatpush1.bf16.xpose.msra.mxu0 0
    %329 = vmatprep.subr.bf16.mxu0 0
    %330 = vmatpush1.bf16.xpose.msra.mxu0 0
    %331 = vmatprep.subr.bf16.mxu0 0
    %332 = vmatpush1.bf16.xpose.msra.mxu0 0
    %333 = vmatprep.subr.bf16.mxu0 0
    %334 = vmatpush1.bf16.xpose.msra.mxu0 0
    %335 = vmatprep.subr.bf16.mxu0 0
    %336 = vmatpush1.bf16.xpose.msra.mxu0 0
    %337 = vmatprep.subr.bf16.mxu0 0
    %338 = vmatpush1.bf16.xpose.msra.mxu0 0
    %339 = vmatprep.subr.bf16.mxu0 0
    %340 = vmatpush1.bf16.xpose.msra.mxu0 0
    %341 = vmatprep.subr.bf16.mxu0 0
    %342 = vmatpush1.bf16.xpose.msra.mxu0 0
    %343 = vmatprep.subr.bf16.mxu0 0
    %344 = vmatpush1.bf16.xpose.msra.mxu0 0
    %345 = vmatprep.mubr.bf16.mxu0 0
    %346 = vmatmul.mubr.bf16.gmra.mrb[0].mxu0 %v308
    %v347 = vpop.f32.mrb[0].mxu0
    %v348 = vadd.f32 %v286, %v347
    %v349 = vpop.f32.mrb[0].mxu0
    %v350 = vpop.f32.mrb[0].mxu0
    %v351 = vpop.f32.mrb[0].mxu0
    %352 = vdwg.mxu0
    %354 = vrot.lane.b32.xlu0 %v276, 96
    %v355 = vpop.permute.xlu0 %354
    %v357 = vsel %vm306, %v276, 0
    %v360 = vsel %vm306, %v355, 0
    %362 = vmatprep.subr.bf16.mxu0 0
    %363 = vmatpush1.bf16.xpose.msra.mxu0 %v360
    %364 = vmatprep.subr.bf16.mxu0 0
    %365 = vmatpush1.bf16.xpose.msra.mxu0 0
    %366 = vmatprep.subr.bf16.mxu0 0
    %367 = vmatpush1.bf16.xpose.msra.mxu0 0
    %368 = vmatprep.subr.bf16.mxu0 0
    %369 = vmatpush1.bf16.xpose.msra.mxu0 0
    %370 = vmatprep.subr.bf16.mxu0 0
    %371 = vmatpush1.bf16.xpose.msra.mxu0 0
    %372 = vmatprep.subr.bf16.mxu0 0
    %373 = vmatpush1.bf16.xpose.msra.mxu0 0
    %374 = vmatprep.subr.bf16.mxu0 0
    %375 = vmatpush1.bf16.xpose.msra.mxu0 0
    %376 = vmatprep.subr.bf16.mxu0 0
    %377 = vmatpush1.bf16.xpose.msra.mxu0 0
    %378 = vmatprep.subr.bf16.mxu0 0
    %379 = vmatpush1.bf16.xpose.msra.mxu0 0
    %380 = vmatprep.subr.bf16.mxu0 0
    %381 = vmatpush1.bf16.xpose.msra.mxu0 0
    %382 = vmatprep.subr.bf16.mxu0 0
    %383 = vmatpush1.bf16.xpose.msra.mxu0 0
    %384 = vmatprep.subr.bf16.mxu0 0
    %385 = vmatpush1.bf16.xpose.msra.mxu0 0
    %386 = vmatprep.subr.bf16.mxu0 0
    %387 = vmatpush1.bf16.xpose.msra.mxu0 0
    %388 = vmatprep.subr.bf16.mxu0 0
    %389 = vmatpush1.bf16.xpose.msra.mxu0 0
    %390 = vmatprep.subr.bf16.mxu0 0
    %391 = vmatpush1.bf16.xpose.msra.mxu0 0
    %392 = vmatprep.subr.bf16.mxu0 0
    %393 = vmatpush1.bf16.xpose.msra.mxu0 0
    %394 = vmatprep.mubr.bf16.mxu0 0
    %395 = vmatmul.mubr.bf16.gmra.mrb[0].mxu0 %v357
    %v396 = vpop.f32.mrb[0].mxu0
    %v397 = vadd.f32 %v290, %v396
    %v398 = vpop.f32.mrb[0].mxu0
    %v399 = vpop.f32.mrb[0].mxu0
    %v400 = vpop.f32.mrb[0].mxu0
    %401 = vdwg.mxu0
    %403 = vrot.lane.b32.xlu0 %v277, 96
    %v404 = vpop.permute.xlu0 %403
    %v406 = vsel %vm306, %v277, 0
    %v409 = vsel %vm306, %v404, 0
    %411 = vmatprep.subr.bf16.mxu0 0
    %412 = vmatpush1.bf16.xpose.msra.mxu0 %v409
    %413 = vmatprep.subr.bf16.mxu0 0
    %414 = vmatpush1.bf16.xpose.msra.mxu0 0
    %415 = vmatprep.subr.bf16.mxu0 0
    %416 = vmatpush1.bf16.xpose.msra.mxu0 0
    %417 = vmatprep.subr.bf16.mxu0 0
    %418 = vmatpush1.bf16.xpose.msra.mxu0 0
    %419 = vmatprep.subr.bf16.mxu0 0
    %420 = vmatpush1.bf16.xpose.msra.mxu0 0
    %421 = vmatprep.subr.bf16.mxu0 0
    %422 = vmatpush1.bf16.xpose.msra.mxu0 0
    %423 = vmatprep.subr.bf16.mxu0 0
    %424 = vmatpush1.bf16.xpose.msra.mxu0 0
    %425 = vmatprep.subr.bf16.mxu0 0
    %426 = vmatpush1.bf16.xpose.msra.mxu0 0
    %427 = vmatprep.subr.bf16.mxu0 0
    %428 = vmatpush1.bf16.xpose.msra.mxu0 0
    %429 = vmatprep.subr.bf16.mxu0 0
    %430 = vmatpush1.bf16.xpose.msra.mxu0 0
    %431 = vmatprep.subr.bf16.mxu0 0
    %432 = vmatpush1.bf16.xpose.msra.mxu0 0
    %433 = vmatprep.subr.bf16.mxu0 0
    %434 = vmatpush1.bf16.xpose.msra.mxu0 0
    %435 = vmatprep.subr.bf16.mxu0 0
    %436 = vmatpush1.bf16.xpose.msra.mxu0 0
    %437 = vmatprep.subr.bf16.mxu0 0
    %438 = vmatpush1.bf16.xpose.msra.mxu0 0
    %439 = vmatprep.subr.bf16.mxu0 0
    %440 = vmatpush1.bf16.xpose.msra.mxu0 0
    %441 = vmatprep.subr.bf16.mxu0 0
    %442 = vmatpush1.bf16.xpose.msra.mxu0 0
    %443 = vmatprep.mubr.bf16.mxu0 0
    %444 = vmatmul.mubr.bf16.gmra.mrb[0].mxu0 %v406
    %v445 = vpop.f32.mrb[0].mxu0
    %v446 = vadd.f32 %v294, %v445
    %v447 = vpop.f32.mrb[0].mxu0
    %v448 = vpop.f32.mrb[0].mxu0
    %v449 = vpop.f32.mrb[0].mxu0
    %450 = vdwg.mxu0
    %452 = vrot.lane.b32.xlu0 %v278, 96
    %v453 = vpop.permute.xlu0 %452
    %v455 = vsel %vm306, %v278, 0
    %v458 = vsel %vm306, %v453, 0
    %460 = vmatprep.subr.bf16.mxu0 0
    %461 = vmatpush1.bf16.xpose.msra.mxu0 %v458
    %462 = vmatprep.subr.bf16.mxu0 0
    %463 = vmatpush1.bf16.xpose.msra.mxu0 0
    %464 = vmatprep.subr.bf16.mxu0 0
    %465 = vmatpush1.bf16.xpose.msra.mxu0 0
    %466 = vmatprep.subr.bf16.mxu0 0
    %467 = vmatpush1.bf16.xpose.msra.mxu0 0
    %468 = vmatprep.subr.bf16.mxu0 0
    %469 = vmatpush1.bf16.xpose.msra.mxu0 0
    %470 = vmatprep.subr.bf16.mxu0 0
    %471 = vmatpush1.bf16.xpose.msra.mxu0 0
    %472 = vmatprep.subr.bf16.mxu0 0
    %473 = vmatpush1.bf16.xpose.msra.mxu0 0
    %474 = vmatprep.subr.bf16.mxu0 0
    %475 = vmatpush1.bf16.xpose.msra.mxu0 0
    %476 = vmatprep.subr.bf16.mxu0 0
    %477 = vmatpush1.bf16.xpose.msra.mxu0 0
    %478 = vmatprep.subr.bf16.mxu0 0
    %479 = vmatpush1.bf16.xpose.msra.mxu0 0
    %480 = vmatprep.subr.bf16.mxu0 0
    %481 = vmatpush1.bf16.xpose.msra.mxu0 0
    %482 = vmatprep.subr.bf16.mxu0 0
    %483 = vmatpush1.bf16.xpose.msra.mxu0 0
    %484 = vmatprep.subr.bf16.mxu0 0
    %485 = vmatpush1.bf16.xpose.msra.mxu0 0
    %486 = vmatprep.subr.bf16.mxu0 0
    %487 = vmatpush1.bf16.xpose.msra.mxu0 0
    %488 = vmatprep.subr.bf16.mxu0 0
    %489 = vmatpush1.bf16.xpose.msra.mxu0 0
    %490 = vmatprep.subr.bf16.mxu0 0
    %491 = vmatpush1.bf16.xpose.msra.mxu0 0
    %492 = vmatprep.mubr.bf16.mxu0 0
    %493 = vmatmul.mubr.bf16.gmra.mrb[0].mxu0 %v455
    %v494 = vpop.f32.mrb[0].mxu0
    %v495 = vadd.f32 %v298, %v494
    %v496 = vpop.f32.mrb[0].mxu0
    %v497 = vpop.f32.mrb[0].mxu0
    %v498 = vpop.f32.mrb[0].mxu0
    %499 = vdwg.mxu0
    %vm500 = vcmask 64512
    %v501 = vsel %vm500, %v348, -inf
    %502 = vmax.xlane.f32.xlu0 %v501
    %v503 = vpop.xlane.xlu0 %502
    %v504 = vsel %vm500, %v397, -inf
    %505 = vmax.xlane.f32.xlu0 %v504
    %v506 = vpop.xlane.xlu0 %505
    %v507 = vsel %vm500, %v446, -inf
    %508 = vmax.xlane.f32.xlu0 %v507
    %v509 = vpop.xlane.xlu0 %508
    %v510 = vsel %vm500, %v495, -inf
    %511 = vmax.xlane.f32.xlu0 %v510
    %v512 = vpop.xlane.xlu0 %511
    %v513 = vsub.f32 %v348, %v503
    %v514 = vsub.f32 %v397, %v506
    %v515 = vsub.f32 %v446, %v509
    %v516 = vsub.f32 %v495, %v512
    %v517 = vmul.f32 %v513, 1.442695
    %v518 = vpow.pop %v517
    %v519 = vmul.f32 %v514, 1.442695
    %v520 = vpow.pop %v519
    %v521 = vmul.f32 %v515, 1.442695
    %v522 = vpow.pop %v521
    %v523 = vmul.f32 %v516, 1.442695
    %v524 = vpow.pop %v523
    %v525 = vsel %vm500, %v518, 0.0
    %526 = vadd.xlane.f32.xlu0 %v525
    %v527 = vpop.xlane.xlu0 %526
    %v528 = vsel %vm500, %v520, 0.0
    %529 = vadd.xlane.f32.xlu0 %v528
    %v530 = vpop.xlane.xlu0 %529
    %v531 = vsel %vm500, %v522, 0.0
    %532 = vadd.xlane.f32.xlu0 %v531
    %v533 = vpop.xlane.xlu0 %532
    %v534 = vsel %vm500, %v524, 0.0
    %535 = vadd.xlane.f32.xlu0 %v534
    %v536 = vpop.xlane.xlu0 %535
    %v537 = vrcp.pop %v527
    %v538 = vrcp.pop %v530
    %v539 = vrcp.pop %v533
    %v540 = vrcp.pop %v536
    %v541 = vmul.f32 %v518, %v537
    %v542 = vmul.f32 %v520, %v538
    %v543 = vmul.f32 %v522, %v539
    %v544 = vmul.f32 %v524, %v540
    %v545 = vpack.c.bf16 %v541, %v541
    %v546 = vpack.c.bf16 %v542, %v542
    %v547 = vpack.c.bf16 %v543, %v543
    %v548 = vpack.c.bf16 %v544, %v544
    %549 = vrot.lane.b32.xlu0 %v275, 64
    %v550 = vpop.permute.xlu0 %549
    %v552 = vsel %vm500, %v545, 0
    %vm554 = vcmask 1043456
    %v556 = vsel %vm554, %v550, 0
    %558 = vmatprep.subr.bf16.mxu0 0
    %559 = vmatpush1.bf16.msra.mxu0 %v556
    %560 = vmatprep.subr.bf16.mxu0 0
    %561 = vmatpush1.bf16.msra.mxu0 0
    %562 = vmatprep.subr.bf16.mxu0 0
    %563 = vmatpush1.bf16.msra.mxu0 0
    %564 = vmatprep.subr.bf16.mxu0 0
    %565 = vmatpush1.bf16.msra.mxu0 0
    %566 = vmatprep.subr.bf16.mxu0 0
    %567 = vmatpush1.bf16.msra.mxu0 0
    %568 = vmatprep.subr.bf16.mxu0 0
    %569 = vmatpush1.bf16.msra.mxu0 0
    %570 = vmatprep.subr.bf16.mxu0 0
    %571 = vmatpush1.bf16.msra.mxu0 0
    %572 = vmatprep.subr.bf16.mxu0 0
    %573 = vmatpush1.bf16.msra.mxu0 0
    %574 = vmatprep.subr.bf16.mxu0 0
    %575 = vmatpush1.bf16.msra.mxu0 0
    %576 = vmatprep.subr.bf16.mxu0 0
    %577 = vmatpush1.bf16.msra.mxu0 0
    %578 = vmatprep.subr.bf16.mxu0 0
    %579 = vmatpush1.bf16.msra.mxu0 0
    %580 = vmatprep.subr.bf16.mxu0 0
    %581 = vmatpush1.bf16.msra.mxu0 0
    %582 = vmatprep.subr.bf16.mxu0 0
    %583 = vmatpush1.bf16.msra.mxu0 0
    %584 = vmatprep.subr.bf16.mxu0 0
    %585 = vmatpush1.bf16.msra.mxu0 0
    %586 = vmatprep.subr.bf16.mxu0 0
    %587 = vmatpush1.bf16.msra.mxu0 0
    %588 = vmatprep.subr.bf16.mxu0 0
    %589 = vmatpush1.bf16.msra.mxu0 0
    %590 = vmatprep.mubr.bf16.mxu0 0
    %591 = vmatmul.mubr.bf16.gmra.mrb[0].mxu0 %v552
    %v592 = vpop.f32.mrb[0].mxu0
    %v593 = vadd.f32 0.0, %v592
    %v594 = vpop.f32.mrb[0].mxu0
    %v595 = vpop.f32.mrb[0].mxu0
    %v596 = vpop.f32.mrb[0].mxu0
    %597 = vdwg.mxu0
    %598 = vrot.lane.b32.xlu0 %v276, 64
    %v599 = vpop.permute.xlu0 %598
    %v601 = vsel %vm500, %v546, 0
    %v604 = vsel %vm554, %v599, 0
    %606 = vmatprep.subr.bf16.mxu0 0
    %607 = vmatpush1.bf16.msra.mxu0 %v604
    %608 = vmatprep.subr.bf16.mxu0 0
    %609 = vmatpush1.bf16.msra.mxu0 0
    %610 = vmatprep.subr.bf16.mxu0 0
    %611 = vmatpush1.bf16.msra.mxu0 0
    %612 = vmatprep.subr.bf16.mxu0 0
    %613 = vmatpush1.bf16.msra.mxu0 0
    %614 = vmatprep.subr.bf16.mxu0 0
    %615 = vmatpush1.bf16.msra.mxu0 0
    %616 = vmatprep.subr.bf16.mxu0 0
    %617 = vmatpush1.bf16.msra.mxu0 0
    %618 = vmatprep.subr.bf16.mxu0 0
    %619 = vmatpush1.bf16.msra.mxu0 0
    %620 = vmatprep.subr.bf16.mxu0 0
    %621 = vmatpush1.bf16.msra.mxu0 0
    %622 = vmatprep.subr.bf16.mxu0 0
    %623 = vmatpush1.bf16.msra.mxu0 0
    %624 = vmatprep.subr.bf16.mxu0 0
    %625 = vmatpush1.bf16.msra.mxu0 0
    %626 = vmatprep.subr.bf16.mxu0 0
    %627 = vmatpush1.bf16.msra.mxu0 0
    %628 = vmatprep.subr.bf16.mxu0 0
    %629 = vmatpush1.bf16.msra.mxu0 0
    %630 = vmatprep.subr.bf16.mxu0 0
    %631 = vmatpush1.bf16.msra.mxu0 0
    %632 = vmatprep.subr.bf16.mxu0 0
    %633 = vmatpush1.bf16.msra.mxu0 0
    %634 = vmatprep.subr.bf16.mxu0 0
    %635 = vmatpush1.bf16.msra.mxu0 0
    %636 = vmatprep.subr.bf16.mxu0 0
    %637 = vmatpush1.bf16.msra.mxu0 0
    %638 = vmatprep.mubr.bf16.mxu0 0
    %639 = vmatmul.mubr.bf16.gmra.mrb[0].mxu0 %v601
    %v640 = vpop.f32.mrb[0].mxu0
    %v641 = vadd.f32 0.0, %v640
    %v642 = vpop.f32.mrb[0].mxu0
    %v643 = vpop.f32.mrb[0].mxu0
    %v644 = vpop.f32.mrb[0].mxu0
    %645 = vdwg.mxu0
    %646 = vrot.lane.b32.xlu0 %v277, 64
    %v647 = vpop.permute.xlu0 %646
    %v649 = vsel %vm500, %v547, 0
    %v652 = vsel %vm554, %v647, 0
    %654 = vmatprep.subr.bf16.mxu0 0
    %655 = vmatpush1.bf16.msra.mxu0 %v652
    %656 = vmatprep.subr.bf16.mxu0 0
    %657 = vmatpush1.bf16.msra.mxu0 0
    %658 = vmatprep.subr.bf16.mxu0 0
    %659 = vmatpush1.bf16.msra.mxu0 0
    %660 = vmatprep.subr.bf16.mxu0 0
    %661 = vmatpush1.bf16.msra.mxu0 0
    %662 = vmatprep.subr.bf16.mxu0 0
    %663 = vmatpush1.bf16.msra.mxu0 0
    %664 = vmatprep.subr.bf16.mxu0 0
    %665 = vmatpush1.bf16.msra.mxu0 0
    %666 = vmatprep.subr.bf16.mxu0 0
    %667 = vmatpush1.bf16.msra.mxu0 0
    %668 = vmatprep.subr.bf16.mxu0 0
    %669 = vmatpush1.bf16.msra.mxu0 0
    %670 = vmatprep.subr.bf16.mxu0 0
    %671 = vmatpush1.bf16.msra.mxu0 0
    %672 = vmatprep.subr.bf16.mxu0 0
    %673 = vmatpush1.bf16.msra.mxu0 0
    %674 = vmatprep.subr.bf16.mxu0 0
    %675 = vmatpush1.bf16.msra.mxu0 0
    %676 = vmatprep.subr.bf16.mxu0 0
    %677 = vmatpush1.bf16.msra.mxu0 0
    %678 = vmatprep.subr.bf16.mxu0 0
    %679 = vmatpush1.bf16.msra.mxu0 0
    %680 = vmatprep.subr.bf16.mxu0 0
    %681 = vmatpush1.bf16.msra.mxu0 0
    %682 = vmatprep.subr.bf16.mxu0 0
    %683 = vmatpush1.bf16.msra.mxu0 0
    %684 = vmatprep.subr.bf16.mxu0 0
    %685 = vmatpush1.bf16.msra.mxu0 0
    %686 = vmatprep.mubr.bf16.mxu0 0
    %687 = vmatmul.mubr.bf16.gmra.mrb[0].mxu0 %v649
    %v688 = vpop.f32.mrb[0].mxu0
    %v689 = vadd.f32 0.0, %v688
    %v690 = vpop.f32.mrb[0].mxu0
    %v691 = vpop.f32.mrb[0].mxu0
    %v692 = vpop.f32.mrb[0].mxu0
    %693 = vdwg.mxu0
    %694 = vrot.lane.b32.xlu0 %v278, 64
    %v695 = vpop.permute.xlu0 %694
    %v697 = vsel %vm500, %v548, 0
    %v700 = vsel %vm554, %v695, 0
    %702 = vmatprep.subr.bf16.mxu0 0
    %703 = vmatpush1.bf16.msra.mxu0 %v700
    %704 = vmatprep.subr.bf16.mxu0 0
    %705 = vmatpush1.bf16.msra.mxu0 0
    %706 = vmatprep.subr.bf16.mxu0 0
    %707 = vmatpush1.bf16.msra.mxu0 0
    %708 = vmatprep.subr.bf16.mxu0 0
    %709 = vmatpush1.bf16.msra.mxu0 0
    %710 = vmatprep.subr.bf16.mxu0 0
    %711 = vmatpush1.bf16.msra.mxu0 0
    %712 = vmatprep.subr.bf16.mxu0 0
    %713 = vmatpush1.bf16.msra.mxu0 0
    %714 = vmatprep.subr.bf16.mxu0 0
    %715 = vmatpush1.bf16.msra.mxu0 0
    %716 = vmatprep.subr.bf16.mxu0 0
    %717 = vmatpush1.bf16.msra.mxu0 0
    %718 = vmatprep.subr.bf16.mxu0 0
    %719 = vmatpush1.bf16.msra.mxu0 0
    %720 = vmatprep.subr.bf16.mxu0 0
    %721 = vmatpush1.bf16.msra.mxu0 0
    %722 = vmatprep.subr.bf16.mxu0 0
    %723 = vmatpush1.bf16.msra.mxu0 0
    %724 = vmatprep.subr.bf16.mxu0 0
    %725 = vmatpush1.bf16.msra.mxu0 0
    %726 = vmatprep.subr.bf16.mxu0 0
    %727 = vmatpush1.bf16.msra.mxu0 0
    %728 = vmatprep.subr.bf16.mxu0 0
    %729 = vmatpush1.bf16.msra.mxu0 0
    %730 = vmatprep.subr.bf16.mxu0 0
    %731 = vmatpush1.bf16.msra.mxu0 0
    %732 = vmatprep.subr.bf16.mxu0 0
    %733 = vmatpush1.bf16.msra.mxu0 0
    %734 = vmatprep.mubr.bf16.mxu0 0
    %735 = vmatmul.mubr.bf16.gmra.mrb[0].mxu0 %v697
    %v736 = vpop.f32.mrb[0].mxu0
    %v737 = vadd.f32 0.0, %v736
    %v738 = vpop.f32.mrb[0].mxu0
    %v739 = vpop.f32.mrb[0].mxu0
    %v740 = vpop.f32.mrb[0].mxu0
    %741 = vdwg.mxu0
    %744 = vrot.lane.b32.xlu0 %v689, 16
    %v745 = vpop.permute.xlu0 %744
    %746 = vrot.lane.b32.xlu0 %v737, 16
    %v747 = vpop.permute.xlu0 %746
    %v750 = vsel %vm306, %v593, %v745
    %v751 = vsel %vm306, %v641, %v747
    %v752 = vpack.c.bf16 %v751, %v750
    %v753 = vld [vmem:[#allocation11] sm:$0xf]
    %v754 = vld [vmem:[#allocation11 + $0x4] sm:$0xf]
    %v755 = vld [vmem:[#allocation11 + $0x8] sm:$0xf]
    %v756 = vld [vmem:[#allocation11 + $0xc] sm:$0xf]
    %v757 = vlaneseq
    %v758 = vshrl.u32 %v757, 7
    %v759 = vsub.s32 1, %v758
    %v760 = vrot.slane %v201, %v759
    %v765 = vunpack.c.l.b16 %v753
    %v766 = vunpack.c.l.b16 %v754
    %v767 = vunpack.c.l.b16 %v755
    %v768 = vunpack.c.l.b16 %v756
    %v769 = vpack.c.b16 %v766, %v765
    %v770 = vpack.c.b16 %v768, %v767
    %v774 = vsel %vm157, %v752, 0
    %776 = vmatprep.subr.bf16.mxu0 0
    %777 = vmatpush1.bf16.msra.mxu0 %v769
    %778 = vmatprep.subr.bf16.mxu0 0
    %779 = vmatpush1.bf16.msra.mxu0 %v770
    %780 = vmatprep.subr.bf16.mxu0 0
    %781 = vmatpush1.bf16.msra.mxu0 0
    %782 = vmatprep.subr.bf16.mxu0 0
    %783 = vmatpush1.bf16.msra.mxu0 0
    %784 = vmatprep.subr.bf16.mxu0 0
    %785 = vmatpush1.bf16.msra.mxu0 0
    %786 = vmatprep.subr.bf16.mxu0 0
    %787 = vmatpush1.bf16.msra.mxu0 0
    %788 = vmatprep.subr.bf16.mxu0 0
    %789 = vmatpush1.bf16.msra.mxu0 0
    %790 = vmatprep.subr.bf16.mxu0 0
    %791 = vmatpush1.bf16.msra.mxu0 0
    %792 = vmatprep.subr.bf16.mxu0 0
    %793 = vmatpush1.bf16.msra.mxu0 0
    %794 = vmatprep.subr.bf16.mxu0 0
    %795 = vmatpush1.bf16.msra.mxu0 0
    %796 = vmatprep.subr.bf16.mxu0 0
    %797 = vmatpush1.bf16.msra.mxu0 0
    %798 = vmatprep.subr.bf16.mxu0 0
    %799 = vmatpush1.bf16.msra.mxu0 0
    %800 = vmatprep.subr.bf16.mxu0 0
    %801 = vmatpush1.bf16.msra.mxu0 0
    %802 = vmatprep.subr.bf16.mxu0 0
    %803 = vmatpush1.bf16.msra.mxu0 0
    %804 = vmatprep.subr.bf16.mxu0 0
    %805 = vmatpush1.bf16.msra.mxu0 0
    %806 = vmatprep.subr.bf16.mxu0 0
    %807 = vmatpush1.bf16.msra.mxu0 0
    %808 = vmatprep.mubr.bf16.mxu0 0
    %809 = vmatmul.mubr.bf16.gmra.mrb[0].mxu0 %v774
    %v810 = vpop.f32.mrb[0].mxu0
    %v811 = vadd.f32 %v760, %v810
    %v812 = vpop.f32.mrb[0].mxu0
    %v813 = vpop.f32.mrb[0].mxu0
    %v814 = vadd.f32 %v760, %v813
    %v815 = vpop.f32.mrb[0].mxu0
    %816 = vdwg.mxu0
    %v817 = vadd.f32 %v195, %v811
    %v818 = vadd.f32 %v196, %v814
    %v819 = vsel %vm157, %v817, 0.0
    %820 = vadd.xlane.f32.xlu0 %v819
    %v821 = vpop.xlane.xlu0 %820
    %v822 = vsel %vm157, %v818, 0.0
    %823 = vadd.xlane.f32.xlu0 %v822
    %v824 = vpop.xlane.xlu0 %823
    %v825 = vmul.f32 %v821, %v164
    %v826 = vmul.f32 %v824, %v164
    %v827 = vsub.f32 %v817, %v825
    %v828 = vsub.f32 %v818, %v826
    %v829 = vmul.f32 %v827, %v827
    %v830 = vmul.f32 %v828, %v828
    %v831 = vsel %vm157, %v829, 0.0
    %832 = vadd.xlane.f32.xlu0 %v831
    %v833 = vpop.xlane.xlu0 %832
    %v834 = vsel %vm157, %v830, 0.0
    %835 = vadd.xlane.f32.xlu0 %v834
    %v836 = vpop.xlane.xlu0 %835
    %v837 = vmul.f32 %v833, %v164
    %v838 = vmul.f32 %v836, %v164
    %v839 = vadd.f32 %v837, 1e-12
    %v840 = vadd.f32 %v838, 1e-12
    %v841 = vrsqrt.pop %v839
    %v842 = vrsqrt.pop %v840
    %v843 = vmul.f32 %v827, %v841
    %v844 = vmul.f32 %v828, %v842
    %v845 = vlaneseq
    %v846 = vshrl.u32 %v845, 7
    %v847 = vsub.s32 2, %v846
    %v848 = vrot.slane %v201, %v847
    %v849 = vmul.f32 %v843, %v848
    %v850 = vmul.f32 %v844, %v848
    %v851 = vlaneseq
    %v852 = vshrl.u32 %v851, 7
    %v853 = vsub.s32 3, %v852
    %v854 = vrot.slane %v201, %v853
    %v855 = vadd.f32 %v849, %v854
    %v856 = vadd.f32 %v850, %v854
    %v857 = vpack.c.bf16 %v856, %v855
    %v858 = vld [vmem:[#allocation13] sm:$0xf]
    %v859 = vld [vmem:[#allocation13 + $0x4] sm:$0xf]
    %v860 = vld [vmem:[#allocation13 + $0x8] sm:$0xf]
    %v861 = vld [vmem:[#allocation13 + $0xc] sm:$0xf]
    %v862 = vlaneseq
    %v863 = vshrl.u32 %v862, 7
    %v864 = vsub.s32 4, %v863
    %v865 = vrot.slane %v201, %v864
    %v870 = vunpack.c.l.b16 %v858
    %v871 = vunpack.c.l.b16 %v859
    %v872 = vunpack.c.l.b16 %v860
    %v873 = vunpack.c.l.b16 %v861
    %v874 = vpack.c.b16 %v871, %v870
    %v875 = vpack.c.b16 %v873, %v872
    %v879 = vsel %vm157, %v857, 0
    %881 = vmatprep.subr.bf16.mxu0 0
    %882 = vmatpush1.bf16.msra.mxu0 %v874
    %883 = vmatprep.subr.bf16.mxu0 0
    %884 = vmatpush1.bf16.msra.mxu0 %v875
    %885 = vmatprep.subr.bf16.mxu0 0
    %886 = vmatpush1.bf16.msra.mxu0 0
    %887 = vmatprep.subr.bf16.mxu0 0
    %888 = vmatpush1.bf16.msra.mxu0 0
    %889 = vmatprep.subr.bf16.mxu0 0
    %890 = vmatpush1.bf16.msra.mxu0 0
    %891 = vmatprep.subr.bf16.mxu0 0
    %892 = vmatpush1.bf16.msra.mxu0 0
    %893 = vmatprep.subr.bf16.mxu0 0
    %894 = vmatpush1.bf16.msra.mxu0 0
    %895 = vmatprep.subr.bf16.mxu0 0
    %896 = vmatpush1.bf16.msra.mxu0 0
    %897 = vmatprep.subr.bf16.mxu0 0
    %898 = vmatpush1.bf16.msra.mxu0 0
    %899 = vmatprep.subr.bf16.mxu0 0
    %900 = vmatpush1.bf16.msra.mxu0 0
    %901 = vmatprep.subr.bf16.mxu0 0
    %902 = vmatpush1.bf16.msra.mxu0 0
    %903 = vmatprep.subr.bf16.mxu0 0
    %904 = vmatpush1.bf16.msra.mxu0 0
    %905 = vmatprep.subr.bf16.mxu0 0
    %906 = vmatpush1.bf16.msra.mxu0 0
    %907 = vmatprep.subr.bf16.mxu0 0
    %908 = vmatpush1.bf16.msra.mxu0 0
    %909 = vmatprep.subr.bf16.mxu0 0
    %910 = vmatpush1.bf16.msra.mxu0 0
    %911 = vmatprep.subr.bf16.mxu0 0
    %912 = vmatpush1.bf16.msra.mxu0 0
    %913 = vmatprep.mubr.bf16.mxu0 0
    %914 = vmatmul.mubr.bf16.gmra.mrb[0].mxu0 %v879
    %v915 = vpop.f32.mrb[0].mxu0
    %v916 = vadd.f32 %v865, %v915
    %v917 = vpop.f32.mrb[0].mxu0
    %v918 = vpop.f32.mrb[0].mxu0
    %v919 = vadd.f32 %v865, %v918
    %v920 = vpop.f32.mrb[0].mxu0
    %921 = vdwg.mxu0
    %v922 = vmul.f32 %v916, 0.5
    %v923 = vmul.f32 %v919, 0.5
    %v924 = vmul.f32 %v916, 0.044715
    %v925 = vmul.f32 %v919, 0.044715
    %v926 = vmul.f32 %v924, %v916
    %v927 = vmul.f32 %v925, %v919
    %v928 = vmul.f32 %v926, %v916
    %v929 = vmul.f32 %v927, %v919
    %v930 = vadd.f32 %v916, %v928
    %v931 = vadd.f32 %v919, %v929
    %v932 = vmul.f32 %v930, 0.7978846
    %v933 = vmul.f32 %v931, 0.7978846
    %v934 = vtanh.pop %v932
    %v935 = vtanh.pop %v933
    %v936 = vadd.f32 %v934, 1.0
    %v937 = vadd.f32 %v935, 1.0
    %v938 = vmul.f32 %v922, %v936
    %v939 = vmul.f32 %v923, %v937
    %v940 = vpack.c.bf16 %v939, %v938
    %v941 = vld [vmem:[#allocation14] sm:$0xf]
    %v942 = vld [vmem:[#allocation14 + $0x4] sm:$0xf]
    %v943 = vld [vmem:[#allocation14 + $0x8] sm:$0xf]
    %v944 = vld [vmem:[#allocation14 + $0xc] sm:$0xf]
    %v945 = vld [vmem:[#allocation14 + $0x10] sm:$0xf]
    %v946 = vld [vmem:[#allocation14 + $0x14] sm:$0xf]
    %v947 = vld [vmem:[#allocation14 + $0x18] sm:$0xf]
    %v948 = vld [vmem:[#allocation14 + $0x1c] sm:$0xf]
    %v949 = vlaneseq
    %v950 = vshrl.u32 %v949, 7
    %v951 = vsub.s32 5, %v950
    %v952 = vrot.slane %v201, %v951
    %v961 = vunpack.c.l.b16 %v941
    %v962 = vunpack.c.l.b16 %v942
    %v963 = vunpack.c.l.b16 %v943
    %v964 = vunpack.c.l.b16 %v944
    %v965 = vunpack.c.l.b16 %v945
    %v966 = vunpack.c.l.b16 %v946
    %v967 = vunpack.c.l.b16 %v947
    %v968 = vunpack.c.l.b16 %v948
    %v969 = vpack.c.b16 %v962, %v961
    %v970 = vpack.c.b16 %v964, %v963
    %v971 = vpack.c.b16 %v966, %v965
    %v972 = vpack.c.b16 %v968, %v967
    %vm977 = vcmask 523264
    %v979 = vsel %vm977, %v940, 0
    %981 = vmatprep.subr.bf16.mxu0 0
    %982 = vmatpush1.bf16.msra.mxu0 %v969
    %983 = vmatprep.subr.bf16.mxu0 0
    %984 = vmatpush1.bf16.msra.mxu0 %v970
    %985 = vmatprep.subr.bf16.mxu0 0
    %986 = vmatpush1.bf16.msra.mxu0 %v971
    %987 = vmatprep.subr.bf16.mxu0 0
    %988 = vmatpush1.bf16.msra.mxu0 %v972
    %989 = vmatprep.subr.bf16.mxu0 0
    %990 = vmatpush1.bf16.msra.mxu0 0
    %991 = vmatprep.subr.bf16.mxu0 0
    %992 = vmatpush1.bf16.msra.mxu0 0
    %993 = vmatprep.subr.bf16.mxu0 0
    %994 = vmatpush1.bf16.msra.mxu0 0
    %995 = vmatprep.subr.bf16.mxu0 0
    %996 = vmatpush1.bf16.msra.mxu0 0
    %997 = vmatprep.subr.bf16.mxu0 0
    %998 = vmatpush1.bf16.msra.mxu0 0
    %999 = vmatprep.subr.bf16.mxu0 0
    %1000 = vmatpush1.bf16.msra.mxu0 0
    %1001 = vmatprep.subr.bf16.mxu0 0
    %1002 = vmatpush1.bf16.msra.mxu0 0
    %1003 = vmatprep.subr.bf16.mxu0 0
    %1004 = vmatpush1.bf16.msra.mxu0 0
    %1005 = vmatprep.subr.bf16.mxu0 0
    %1006 = vmatpush1.bf16.msra.mxu0 0
    %1007 = vmatprep.subr.bf16.mxu0 0
    %1008 = vmatpush1.bf16.msra.mxu0 0
    %1009 = vmatprep.subr.bf16.mxu0 0
    %1010 = vmatpush1.bf16.msra.mxu0 0
    %1011 = vmatprep.subr.bf16.mxu0 0
    %1012 = vmatpush1.bf16.msra.mxu0 0
    %1013 = vmatprep.mubr.bf16.mxu0 0
    %1014 = vmatmul.mubr.bf16.gmra.mrb[0].mxu0 %v979
    %v1015 = vpop.f32.mrb[0].mxu0
    %v1016 = vadd.f32 %v952, %v1015
    %v1017 = vpop.f32.mrb[0].mxu0
    %v1018 = vpop.f32.mrb[0].mxu0
    %v1019 = vadd.f32 %v952, %v1018
    %v1020 = vpop.f32.mrb[0].mxu0
    %1021 = vdwg.mxu0
    %v1022 = vadd.f32 %v855, %v1016
    %v1023 = vadd.f32 %v856, %v1019
    %v1024 = vsel %vm157, %v1022, 0.0
    %1025 = vadd.xlane.f32.xlu0 %v1024
    %v1026 = vpop.xlane.xlu0 %1025
    %v1027 = vsel %vm157, %v1023, 0.0
    %1028 = vadd.xlane.f32.xlu0 %v1027
    %v1029 = vpop.xlane.xlu0 %1028
    %v1030 = vmul.f32 %v1026, %v164
    %v1031 = vmul.f32 %v1029, %v164
    %v1032 = vsub.f32 %v1022, %v1030
    %v1033 = vsub.f32 %v1023, %v1031
    %v1034 = vmul.f32 %v1032, %v1032
    %v1035 = vmul.f32 %v1033, %v1033
    %v1036 = vsel %vm157, %v1034, 0.0
    %1037 = vadd.xlane.f32.xlu0 %v1036
    %v1038 = vpop.xlane.xlu0 %1037
    %v1039 = vsel %vm157, %v1035, 0.0
    %1040 = vadd.xlane.f32.xlu0 %v1039
    %v1041 = vpop.xlane.xlu0 %1040
    %v1042 = vmul.f32 %v1038, %v164
    %v1043 = vmul.f32 %v1041, %v164
    %v1044 = vadd.f32 %v1042, 1e-12
    %v1045 = vadd.f32 %v1043, 1e-12
    %v1046 = vrsqrt.pop %v1044
    %v1047 = vrsqrt.pop %v1045
    %v1048 = vmul.f32 %v1032, %v1046
    %v1049 = vmul.f32 %v1033, %v1047
    %v1050 = vlaneseq
    %v1051 = vshrl.u32 %v1050, 7
    %v1052 = vsub.s32 6, %v1051
    %v1053 = vrot.slane %v201, %v1052
    %v1054 = vmul.f32 %v1048, %v1053
    %v1055 = vmul.f32 %v1049, %v1053
    %v1056 = vlaneseq
    %v1057 = vshrl.u32 %v1056, 7
    %v1058 = vsub.s32 7, %v1057
    %v1059 = vrot.slane %v201, %v1058
    %v1060 = vadd.f32 %v1054, %v1059
    %v1061 = vadd.f32 %v1055, %v1059
    %s1062 = scalar_lea.vmem [#allocation8], 8
    %v1063 = vld [vmem:[%s1062] sm:$0xff]
    %v1064 = vpack.c.bf16 %v1061, %v1060
    %s1065 = scalar_lea.vmem [#allocation10], 16
    %v1066 = vld [vmem:[%s1065] sm:$0xf]
    %v1067 = vld [vmem:[%s1065 + $0x4] sm:$0xf]
    %v1068 = vld [vmem:[%s1065 + $0x8] sm:$0xf]
    %v1069 = vld [vmem:[%s1065 + $0xc] sm:$0xf]
    %v1070 = vlaneseq
    %v1071 = vshrl.u32 %v1070, 7
    %v1072 = vsub.s32 0, %v1071
    %v1073 = vrot.slane %v1063, %v1072
    %v1078 = vunpack.c.l.b16 %v1066
    %v1079 = vunpack.c.l.b16 %v1067
    %v1080 = vunpack.c.l.b16 %v1068
    %v1081 = vunpack.c.l.b16 %v1069
    %v1082 = vpack.c.b16 %v1079, %v1078
    %v1083 = vpack.c.b16 %v1081, %v1080
    %v1087 = vsel %vm157, %v1064, 0
    %1089 = vmatprep.subr.bf16.mxu0 0
    %1090 = vmatpush1.bf16.msra.mxu0 %v1082
    %1091 = vmatprep.subr.bf16.mxu0 0
    %1092 = vmatpush1.bf16.msra.mxu0 %v1083
    %1093 = vmatprep.subr.bf16.mxu0 0
    %1094 = vmatpush1.bf16.msra.mxu0 0
    %1095 = vmatprep.subr.bf16.mxu0 0
    %1096 = vmatpush1.bf16.msra.mxu0 0
    %1097 = vmatprep.subr.bf16.mxu0 0
    %1098 = vmatpush1.bf16.msra.mxu0 0
    %1099 = vmatprep.subr.bf16.mxu0 0
    %1100 = vmatpush1.bf16.msra.mxu0 0
    %1101 = vmatprep.subr.bf16.mxu0 0
    %1102 = vmatpush1.bf16.msra.mxu0 0
    %1103 = vmatprep.subr.bf16.mxu0 0
    %1104 = vmatpush1.bf16.msra.mxu0 0
    %1105 = vmatprep.subr.bf16.mxu0 0
    %1106 = vmatpush1.bf16.msra.mxu0 0
    %1107 = vmatprep.subr.bf16.mxu0 0
    %1108 = vmatpush1.bf16.msra.mxu0 0
    %1109 = vmatprep.subr.bf16.mxu0 0
    %1110 = vmatpush1.bf16.msra.mxu0 0
    %1111 = vmatprep.subr.bf16.mxu0 0
    %1112 = vmatpush1.bf16.msra.mxu0 0
    %1113 = vmatprep.subr.bf16.mxu0 0
    %1114 = vmatpush1.bf16.msra.mxu0 0
    %1115 = vmatprep.subr.bf16.mxu0 0
    %1116 = vmatpush1.bf16.msra.mxu0 0
    %1117 = vmatprep.subr.bf16.mxu0 0
    %1118 = vmatpush1.bf16.msra.mxu0 0
    %1119 = vmatprep.subr.bf16.mxu0 0
    %1120 = vmatpush1.bf16.msra.mxu0 0
    %1121 = vmatprep.mubr.bf16.mxu0 0
    %1122 = vmatmul.mubr.bf16.gmra.mrb[0].mxu0 %v1087
    %v1123 = vpop.f32.mrb[0].mxu0
    %v1124 = vadd.f32 %v1073, %v1123
    %v1125 = vpop.f32.mrb[0].mxu0
    %v1126 = vpop.f32.mrb[0].mxu0
    %v1127 = vadd.f32 %v1073, %v1126
    %v1128 = vpop.f32.mrb[0].mxu0
    %1129 = vdwg.mxu0
    %1132 = vrot.lane.b32.xlu0 %v1124, 112
    %v1133 = vpop.permute.xlu0 %1132
    %1134 = vrot.lane.b32.xlu0 %v1127, 112
    %v1135 = vpop.permute.xlu0 %1134
    %v1138 = vpack.c.bf16 %v1124, %v1124
    %v1139 = vpack.c.bf16 %v1127, %v1127
    %v1140 = vpack.c.bf16 %v1133, %v1133
    %v1141 = vpack.c.bf16 %v1135, %v1135
    %1143 = vrot.lane.b32.xlu0 %v1138, 96
    %v1144 = vpop.permute.xlu0 %1143
    %v1146 = vsel %vm306, %v1138, 0
    %v1149 = vsel %vm306, %v1144, 0
    %1151 = vmatprep.subr.bf16.mxu0 0
    %1152 = vmatpush1.bf16.xpose.msra.mxu0 %v1149
    %1153 = vmatprep.subr.bf16.mxu0 0
    %1154 = vmatpush1.bf16.xpose.msra.mxu0 0
    %1155 = vmatprep.subr.bf16.mxu0 0
    %1156 = vmatpush1.bf16.xpose.msra.mxu0 0
    %1157 = vmatprep.subr.bf16.mxu0 0
    %1158 = vmatpush1.bf16.xpose.msra.mxu0 0
    %1159 = vmatprep.subr.bf16.mxu0 0
    %1160 = vmatpush1.bf16.xpose.msra.mxu0 0
    %1161 = vmatprep.subr.bf16.mxu0 0
    %1162 = vmatpush1.bf16.xpose.msra.mxu0 0
    %1163 = vmatprep.subr.bf16.mxu0 0
    %1164 = vmatpush1.bf16.xpose.msra.mxu0 0
    %1165 = vmatprep.subr.bf16.mxu0 0
    %1166 = vmatpush1.bf16.xpose.msra.mxu0 0
    %1167 = vmatprep.subr.bf16.mxu0 0
    %1168 = vmatpush1.bf16.xpose.msra.mxu0 0
    %1169 = vmatprep.subr.bf16.mxu0 0
    %1170 = vmatpush1.bf16.xpose.msra.mxu0 0
    %1171 = vmatprep.subr.bf16.mxu0 0
    %1172 = vmatpush1.bf16.xpose.msra.mxu0 0
    %1173 = vmatprep.subr.bf16.mxu0 0
    %1174 = vmatpush1.bf16.xpose.msra.mxu0 0
    %1175 = vmatprep.subr.bf16.mxu0 0
    %1176 = vmatpush1.bf16.xpose.msra.mxu0 0
    %1177 = vmatprep.subr.bf16.mxu0 0
    %1178 = vmatpush1.bf16.xpose.msra.mxu0 0
    %1179 = vmatprep.subr.bf16.mxu0 0
    %1180 = vmatpush1.bf16.xpose.msra.mxu0 0
    %1181 = vmatprep.subr.bf16.mxu0 0
    %1182 = vmatpush1.bf16.xpose.msra.mxu0 0
    %1183 = vmatprep.mubr.bf16.mxu0 0
    %1184 = vmatmul.mubr.bf16.gmra.mrb[0].mxu0 %v1146
    %v1185 = vpop.f32.mrb[0].mxu0
    %v1186 = vadd.f32 %v286, %v1185
    %v1187 = vpop.f32.mrb[0].mxu0
    %v1188 = vpop.f32.mrb[0].mxu0
    %v1189 = vpop.f32.mrb[0].mxu0
    %1190 = vdwg.mxu0
    %1192 = vrot.lane.b32.xlu0 %v1139, 96
    %v1193 = vpop.permute.xlu0 %1192
    %v1195 = vsel %vm306, %v1139, 0
    %v1198 = vsel %vm306, %v1193, 0
    %1200 = vmatprep.subr.bf16.mxu0 0
    %1201 = vmatpush1.bf16.xpose.msra.mxu0 %v1198
    %1202 = vmatprep.subr.bf16.mxu0 0
    %1203 = vmatpush1.bf16.xpose.msra.mxu0 0
    %1204 = vmatprep.subr.bf16.mxu0 0
    %1205 = vmatpush1.bf16.xpose.msra.mxu0 0
    %1206 = vmatprep.subr.bf16.mxu0 0
    %1207 = vmatpush1.bf16.xpose.msra.mxu0 0
    %1208 = vmatprep.subr.bf16.mxu0 0
    %1209 = vmatpush1.bf16.xpose.msra.mxu0 0
    %1210 = vmatprep.subr.bf16.mxu0 0
    %1211 = vmatpush1.bf16.xpose.msra.mxu0 0
    %1212 = vmatprep.subr.bf16.mxu0 0
    %1213 = vmatpush1.bf16.xpose.msra.mxu0 0
    %1214 = vmatprep.subr.bf16.mxu0 0
    %1215 = vmatpush1.bf16.xpose.msra.mxu0 0
    %1216 = vmatprep.subr.bf16.mxu0 0
    %1217 = vmatpush1.bf16.xpose.msra.mxu0 0
    %1218 = vmatprep.subr.bf16.mxu0 0
    %1219 = vmatpush1.bf16.xpose.msra.mxu0 0
    %1220 = vmatprep.subr.bf16.mxu0 0
    %1221 = vmatpush1.bf16.xpose.msra.mxu0 0
    %1222 = vmatprep.subr.bf16.mxu0 0
    %1223 = vmatpush1.bf16.xpose.msra.mxu0 0
    %1224 = vmatprep.subr.bf16.mxu0 0
    %1225 = vmatpush1.bf16.xpose.msra.mxu0 0
    %1226 = vmatprep.subr.bf16.mxu0 0
    %1227 = vmatpush1.bf16.xpose.msra.mxu0 0
    %1228 = vmatprep.subr.bf16.mxu0 0
    %1229 = vmatpush1.bf16.xpose.msra.mxu0 0
    %1230 = vmatprep.subr.bf16.mxu0 0
    %1231 = vmatpush1.bf16.xpose.msra.mxu0 0
    %1232 = vmatprep.mubr.bf16.mxu0 0
    %1233 = vmatmul.mubr.bf16.gmra.mrb[0].mxu0 %v1195
    %v1234 = vpop.f32.mrb[0].mxu0
    %v1235 = vadd.f32 %v290, %v1234
    %v1236 = vpop.f32.mrb[0].mxu0
    %v1237 = vpop.f32.mrb[0].mxu0
    %v1238 = vpop.f32.mrb[0].mxu0
    %1239 = vdwg.mxu0
    %1241 = vrot.lane.b32.xlu0 %v1140, 96
    %v1242 = vpop.permute.xlu0 %1241
    %v1244 = vsel %vm306, %v1140, 0
    %v1247 = vsel %vm306, %v1242, 0
    %1249 = vmatprep.subr.bf16.mxu0 0
    %1250 = vmatpush1.bf16.xpose.msra.mxu0 %v1247
    %1251 = vmatprep.subr.bf16.mxu0 0
    %1252 = vmatpush1.bf16.xpose.msra.mxu0 0
    %1253 = vmatprep.subr.bf16.mxu0 0
    %1254 = vmatpush1.bf16.xpose.msra.mxu0 0
    %1255 = vmatprep.subr.bf16.mxu0 0
    %1256 = vmatpush1.bf16.xpose.msra.mxu0 0
    %1257 = vmatprep.subr.bf16.mxu0 0
    %1258 = vmatpush1.bf16.xpose.msra.mxu0 0
    %1259 = vmatprep.subr.bf16.mxu0 0
    %1260 = vmatpush1.bf16.xpose.msra.mxu0 0
    %1261 = vmatprep.subr.bf16.mxu0 0
    %1262 = vmatpush1.bf16.xpose.msra.mxu0 0
    %1263 = vmatprep.subr.bf16.mxu0 0
    %1264 = vmatpush1.bf16.xpose.msra.mxu0 0
    %1265 = vmatprep.subr.bf16.mxu0 0
    %1266 = vmatpush1.bf16.xpose.msra.mxu0 0
    %1267 = vmatprep.subr.bf16.mxu0 0
    %1268 = vmatpush1.bf16.xpose.msra.mxu0 0
    %1269 = vmatprep.subr.bf16.mxu0 0
    %1270 = vmatpush1.bf16.xpose.msra.mxu0 0
    %1271 = vmatprep.subr.bf16.mxu0 0
    %1272 = vmatpush1.bf16.xpose.msra.mxu0 0
    %1273 = vmatprep.subr.bf16.mxu0 0
    %1274 = vmatpush1.bf16.xpose.msra.mxu0 0
    %1275 = vmatprep.subr.bf16.mxu0 0
    %1276 = vmatpush1.bf16.xpose.msra.mxu0 0
    %1277 = vmatprep.subr.bf16.mxu0 0
    %1278 = vmatpush1.bf16.xpose.msra.mxu0 0
    %1279 = vmatprep.subr.bf16.mxu0 0
    %1280 = vmatpush1.bf16.xpose.msra.mxu0 0
    %1281 = vmatprep.mubr.bf16.mxu0 0
    %1282 = vmatmul.mubr.bf16.gmra.mrb[0].mxu0 %v1244
    %v1283 = vpop.f32.mrb[0].mxu0
    %v1284 = vadd.f32 %v294, %v1283
    %v1285 = vpop.f32.mrb[0].mxu0
    %v1286 = vpop.f32.mrb[0].mxu0
    %v1287 = vpop.f32.mrb[0].mxu0
    %1288 = vdwg.mxu0
    %1290 = vrot.lane.b32.xlu0 %v1141, 96
    %v1291 = vpop.permute.xlu0 %1290
    %v1293 = vsel %vm306, %v1141, 0
    %v1296 = vsel %vm306, %v1291, 0
    %1298 = vmatprep.subr.bf16.mxu0 0
    %1299 = vmatpush1.bf16.xpose.msra.mxu0 %v1296
    %1300 = vmatprep.subr.bf16.mxu0 0
    %1301 = vmatpush1.bf16.xpose.msra.mxu0 0
    %1302 = vmatprep.subr.bf16.mxu0 0
    %1303 = vmatpush1.bf16.xpose.msra.mxu0 0
    %1304 = vmatprep.subr.bf16.mxu0 0
    %1305 = vmatpush1.bf16.xpose.msra.mxu0 0
    %1306 = vmatprep.subr.bf16.mxu0 0
    %1307 = vmatpush1.bf16.xpose.msra.mxu0 0
    %1308 = vmatprep.subr.bf16.mxu0 0
    %1309 = vmatpush1.bf16.xpose.msra.mxu0 0
    %1310 = vmatprep.subr.bf16.mxu0 0
    %1311 = vmatpush1.bf16.xpose.msra.mxu0 0
    %1312 = vmatprep.subr.bf16.mxu0 0
    %1313 = vmatpush1.bf16.xpose.msra.mxu0 0
    %1314 = vmatprep.subr.bf16.mxu0 0
    %1315 = vmatpush1.bf16.xpose.msra.mxu0 0
    %1316 = vmatprep.subr.bf16.mxu0 0
    %1317 = vmatpush1.bf16.xpose.msra.mxu0 0
    %1318 = vmatprep.subr.bf16.mxu0 0
    %1319 = vmatpush1.bf16.xpose.msra.mxu0 0
    %1320 = vmatprep.subr.bf16.mxu0 0
    %1321 = vmatpush1.bf16.xpose.msra.mxu0 0
    %1322 = vmatprep.subr.bf16.mxu0 0
    %1323 = vmatpush1.bf16.xpose.msra.mxu0 0
    %1324 = vmatprep.subr.bf16.mxu0 0
    %1325 = vmatpush1.bf16.xpose.msra.mxu0 0
    %1326 = vmatprep.subr.bf16.mxu0 0
    %1327 = vmatpush1.bf16.xpose.msra.mxu0 0
    %1328 = vmatprep.subr.bf16.mxu0 0
    %1329 = vmatpush1.bf16.xpose.msra.mxu0 0
    %1330 = vmatprep.mubr.bf16.mxu0 0
    %1331 = vmatmul.mubr.bf16.gmra.mrb[0].mxu0 %v1293
    %v1332 = vpop.f32.mrb[0].mxu0
    %v1333 = vadd.f32 %v298, %v1332
    %v1334 = vpop.f32.mrb[0].mxu0
    %v1335 = vpop.f32.mrb[0].mxu0
    %v1336 = vpop.f32.mrb[0].mxu0
    %1337 = vdwg.mxu0
    %v1338 = vsel %vm500, %v1186, -inf
    %1339 = vmax.xlane.f32.xlu0 %v1338
    %v1340 = vpop.xlane.xlu0 %1339
    %v1341 = vsel %vm500, %v1235, -inf
    %1342 = vmax.xlane.f32.xlu0 %v1341
    %v1343 = vpop.xlane.xlu0 %1342
    %v1344 = vsel %vm500, %v1284, -inf
    %1345 = vmax.xlane.f32.xlu0 %v1344
    %v1346 = vpop.xlane.xlu0 %1345
    %v1347 = vsel %vm500, %v1333, -inf
    %1348 = vmax.xlane.f32.xlu0 %v1347
    %v1349 = vpop.xlane.xlu0 %1348
    %v1350 = vsub.f32 %v1186, %v1340
    %v1351 = vsub.f32 %v1235, %v1343
    %v1352 = vsub.f32 %v1284, %v1346
    %v1353 = vsub.f32 %v1333, %v1349
    %v1354 = vmul.f32 %v1350, 1.442695
    %v1355 = vpow.pop %v1354
    %v1356 = vmul.f32 %v1351, 1.442695
    %v1357 = vpow.pop %v1356
    %v1358 = vmul.f32 %v1352, 1.442695
    %v1359 = vpow.pop %v1358
    %v1360 = vmul.f32 %v1353, 1.442695
    %v1361 = vpow.pop %v1360
    %v1362 = vsel %vm500, %v1355, 0.0
    %1363 = vadd.xlane.f32.xlu0 %v1362
    %v1364 = vpop.xlane.xlu0 %1363
    %v1365 = vsel %vm500, %v1357, 0.0
    %1366 = vadd.xlane.f32.xlu0 %v1365
    %v1367 = vpop.xlane.xlu0 %1366
    %v1368 = vsel %vm500, %v1359, 0.0
    %1369 = vadd.xlane.f32.xlu0 %v1368
    %v1370 = vpop.xlane.xlu0 %1369
    %v1371 = vsel %vm500, %v1361, 0.0
    %1372 = vadd.xlane.f32.xlu0 %v1371
    %v1373 = vpop.xlane.xlu0 %1372
    %v1374 = vrcp.pop %v1364
    %v1375 = vrcp.pop %v1367
    %v1376 = vrcp.pop %v1370
    %v1377 = vrcp.pop %v1373
    %v1378 = vmul.f32 %v1355, %v1374
    %v1379 = vmul.f32 %v1357, %v1375
    %v1380 = vmul.f32 %v1359, %v1376
    %v1381 = vmul.f32 %v1361, %v1377
    %v1382 = vpack.c.bf16 %v1378, %v1378
    %v1383 = vpack.c.bf16 %v1379, %v1379
    %v1384 = vpack.c.bf16 %v1380, %v1380
    %v1385 = vpack.c.bf16 %v1381, %v1381
    %1386 = vrot.lane.b32.xlu0 %v1138, 64
    %v1387 = vpop.permute.xlu0 %1386
    %v1389 = vsel %vm500, %v1382, 0
    %v1392 = vsel %vm554, %v1387, 0
    %1394 = vmatprep.subr.bf16.mxu0 0
    %1395 = vmatpush1.bf16.msra.mxu0 %v1392
    %1396 = vmatprep.subr.bf16.mxu0 0
    %1397 = vmatpush1.bf16.msra.mxu0 0
    %1398 = vmatprep.subr.bf16.mxu0 0
    %1399 = vmatpush1.bf16.msra.mxu0 0
    %1400 = vmatprep.subr.bf16.mxu0 0
    %1401 = vmatpush1.bf16.msra.mxu0 0
    %1402 = vmatprep.subr.bf16.mxu0 0
    %1403 = vmatpush1.bf16.msra.mxu0 0
    %1404 = vmatprep.subr.bf16.mxu0 0
    %1405 = vmatpush1.bf16.msra.mxu0 0
    %1406 = vmatprep.subr.bf16.mxu0 0
    %1407 = vmatpush1.bf16.msra.mxu0 0
    %1408 = vmatprep.subr.bf16.mxu0 0
    %1409 = vmatpush1.bf16.msra.mxu0 0
    %1410 = vmatprep.subr.bf16.mxu0 0
    %1411 = vmatpush1.bf16.msra.mxu0 0
    %1412 = vmatprep.subr.bf16.mxu0 0
    %1413 = vmatpush1.bf16.msra.mxu0 0
    %1414 = vmatprep.subr.bf16.mxu0 0
    %1415 = vmatpush1.bf16.msra.mxu0 0
    %1416 = vmatprep.subr.bf16.mxu0 0
    %1417 = vmatpush1.bf16.msra.mxu0 0
    %1418 = vmatprep.subr.bf16.mxu0 0
    %1419 = vmatpush1.bf16.msra.mxu0 0
    %1420 = vmatprep.subr.bf16.mxu0 0
    %1421 = vmatpush1.bf16.msra.mxu0 0
    %1422 = vmatprep.subr.bf16.mxu0 0
    %1423 = vmatpush1.bf16.msra.mxu0 0
    %1424 = vmatprep.subr.bf16.mxu0 0
    %1425 = vmatpush1.bf16.msra.mxu0 0
    %1426 = vmatprep.mubr.bf16.mxu0 0
    %1427 = vmatmul.mubr.bf16.gmra.mrb[0].mxu0 %v1389
    %v1428 = vpop.f32.mrb[0].mxu0
    %v1429 = vadd.f32 0.0, %v1428
    %v1430 = vpop.f32.mrb[0].mxu0
    %v1431 = vpop.f32.mrb[0].mxu0
    %v1432 = vpop.f32.mrb[0].mxu0
    %1433 = vdwg.mxu0
    %1434 = vrot.lane.b32.xlu0 %v1139, 64
    %v1435 = vpop.permute.xlu0 %1434
    %v1437 = vsel %vm500, %v1383, 0
    %v1440 = vsel %vm554, %v1435, 0
    %1442 = vmatprep.subr.bf16.mxu0 0
    %1443 = vmatpush1.bf16.msra.mxu0 %v1440
    %1444 = vmatprep.subr.bf16.mxu0 0
    %1445 = vmatpush1.bf16.msra.mxu0 0
    %1446 = vmatprep.subr.bf16.mxu0 0
    %1447 = vmatpush1.bf16.msra.mxu0 0
    %1448 = vmatprep.subr.bf16.mxu0 0
    %1449 = vmatpush1.bf16.msra.mxu0 0
    %1450 = vmatprep.subr.bf16.mxu0 0
    %1451 = vmatpush1.bf16.msra.mxu0 0
    %1452 = vmatprep.subr.bf16.mxu0 0
    %1453 = vmatpush1.bf16.msra.mxu0 0
    %1454 = vmatprep.subr.bf16.mxu0 0
    %1455 = vmatpush1.bf16.msra.mxu0 0
    %1456 = vmatprep.subr.bf16.mxu0 0
    %1457 = vmatpush1.bf16.msra.mxu0 0
    %1458 = vmatprep.subr.bf16.mxu0 0
    %1459 = vmatpush1.bf16.msra.mxu0 0
    %1460 = vmatprep.subr.bf16.mxu0 0
    %1461 = vmatpush1.bf16.msra.mxu0 0
    %1462 = vmatprep.subr.bf16.mxu0 0
    %1463 = vmatpush1.bf16.msra.mxu0 0
    %1464 = vmatprep.subr.bf16.mxu0 0
    %1465 = vmatpush1.bf16.msra.mxu0 0
    %1466 = vmatprep.subr.bf16.mxu0 0
    %1467 = vmatpush1.bf16.msra.mxu0 0
    %1468 = vmatprep.subr.bf16.mxu0 0
    %1469 = vmatpush1.bf16.msra.mxu0 0
    %1470 = vmatprep.subr.bf16.mxu0 0
    %1471 = vmatpush1.bf16.msra.mxu0 0
    %1472 = vmatprep.subr.bf16.mxu0 0
    %1473 = vmatpush1.bf16.msra.mxu0 0
    %1474 = vmatprep.mubr.bf16.mxu0 0
    %1475 = vmatmul.mubr.bf16.gmra.mrb[0].mxu0 %v1437
    %v1476 = vpop.f32.mrb[0].mxu0
    %v1477 = vadd.f32 0.0, %v1476
    %v1478 = vpop.f32.mrb[0].mxu0
    %v1479 = vpop.f32.mrb[0].mxu0
    %v1480 = vpop.f32.mrb[0].mxu0
    %1481 = vdwg.mxu0
    %1482 = vrot.lane.b32.xlu0 %v1140, 64
    %v1483 = vpop.permute.xlu0 %1482
    %v1485 = vsel %vm500, %v1384, 0
    %v1488 = vsel %vm554, %v1483, 0
    %1490 = vmatprep.subr.bf16.mxu0 0
    %1491 = vmatpush1.bf16.msra.mxu0 %v1488
    %1492 = vmatprep.subr.bf16.mxu0 0
    %1493 = vmatpush1.bf16.msra.mxu0 0
    %1494 = vmatprep.subr.bf16.mxu0 0
    %1495 = vmatpush1.bf16.msra.mxu0 0
    %1496 = vmatprep.subr.bf16.mxu0 0
    %1497 = vmatpush1.bf16.msra.mxu0 0
    %1498 = vmatprep.subr.bf16.mxu0 0
    %1499 = vmatpush1.bf16.msra.mxu0 0
    %1500 = vmatprep.subr.bf16.mxu0 0
    %1501 = vmatpush1.bf16.msra.mxu0 0
    %1502 = vmatprep.subr.bf16.mxu0 0
    %1503 = vmatpush1.bf16.msra.mxu0 0
    %1504 = vmatprep.subr.bf16.mxu0 0
    %1505 = vmatpush1.bf16.msra.mxu0 0
    %1506 = vmatprep.subr.bf16.mxu0 0
    %1507 = vmatpush1.bf16.msra.mxu0 0
    %1508 = vmatprep.subr.bf16.mxu0 0
    %1509 = vmatpush1.bf16.msra.mxu0 0
    %1510 = vmatprep.subr.bf16.mxu0 0
    %1511 = vmatpush1.bf16.msra.mxu0 0
    %1512 = vmatprep.subr.bf16.mxu0 0
    %1513 = vmatpush1.bf16.msra.mxu0 0
    %1514 = vmatprep.subr.bf16.mxu0 0
    %1515 = vmatpush1.bf16.msra.mxu0 0
    %1516 = vmatprep.subr.bf16.mxu0 0
    %1517 = vmatpush1.bf16.msra.mxu0 0
    %1518 = vmatprep.subr.bf16.mxu0 0
    %1519 = vmatpush1.bf16.msra.mxu0 0
    %1520 = vmatprep.subr.bf16.mxu0 0
    %1521 = vmatpush1.bf16.msra.mxu0 0
    %1522 = vmatprep.mubr.bf16.mxu0 0
    %1523 = vmatmul.mubr.bf16.gmra.mrb[0].mxu0 %v1485
    %v1524 = vpop.f32.mrb[0].mxu0
    %v1525 = vadd.f32 0.0, %v1524
    %v1526 = vpop.f32.mrb[0].mxu0
    %v1527 = vpop.f32.mrb[0].mxu0
    %v1528 = vpop.f32.mrb[0].mxu0
    %1529 = vdwg.mxu0
    %1530 = vrot.lane.b32.xlu0 %v1141, 64
    %v1531 = vpop.permute.xlu0 %1530
    %v1533 = vsel %vm500, %v1385, 0
    %v1536 = vsel %vm554, %v1531, 0
    %1538 = vmatprep.subr.bf16.mxu0 0
    %1539 = vmatpush1.bf16.msra.mxu0 %v1536
    %1540 = vmatprep.subr.bf16.mxu0 0
    %1541 = vmatpush1.bf16.msra.mxu0 0
    %1542 = vmatprep.subr.bf16.mxu0 0
    %1543 = vmatpush1.bf16.msra.mxu0 0
    %1544 = vmatprep.subr.bf16.mxu0 0
    %1545 = vmatpush1.bf16.msra.mxu0 0
    %1546 = vmatprep.subr.bf16.mxu0 0
    %1547 = vmatpush1.bf16.msra.mxu0 0
    %1548 = vmatprep.subr.bf16.mxu0 0
    %1549 = vmatpush1.bf16.msra.mxu0 0
    %1550 = vmatprep.subr.bf16.mxu0 0
    %1551 = vmatpush1.bf16.msra.mxu0 0
    %1552 = vmatprep.subr.bf16.mxu0 0
    %1553 = vmatpush1.bf16.msra.mxu0 0
    %1554 = vmatprep.subr.bf16.mxu0 0
    %1555 = vmatpush1.bf16.msra.mxu0 0
    %1556 = vmatprep.subr.bf16.mxu0 0
    %1557 = vmatpush1.bf16.msra.mxu0 0
    %1558 = vmatprep.subr.bf16.mxu0 0
    %1559 = vmatpush1.bf16.msra.mxu0 0
    %1560 = vmatprep.subr.bf16.mxu0 0
    %1561 = vmatpush1.bf16.msra.mxu0 0
    %1562 = vmatprep.subr.bf16.mxu0 0
    %1563 = vmatpush1.bf16.msra.mxu0 0
    %1564 = vmatprep.subr.bf16.mxu0 0
    %1565 = vmatpush1.bf16.msra.mxu0 0
    %1566 = vmatprep.subr.bf16.mxu0 0
    %1567 = vmatpush1.bf16.msra.mxu0 0
    %1568 = vmatprep.subr.bf16.mxu0 0
    %1569 = vmatpush1.bf16.msra.mxu0 0
    %1570 = vmatprep.mubr.bf16.mxu0 0
    %1571 = vmatmul.mubr.bf16.gmra.mrb[0].mxu0 %v1533
    %v1572 = vpop.f32.mrb[0].mxu0
    %v1573 = vadd.f32 0.0, %v1572
    %v1574 = vpop.f32.mrb[0].mxu0
    %v1575 = vpop.f32.mrb[0].mxu0
    %v1576 = vpop.f32.mrb[0].mxu0
    %1577 = vdwg.mxu0
    %1580 = vrot.lane.b32.xlu0 %v1525, 16
    %v1581 = vpop.permute.xlu0 %1580
    %1582 = vrot.lane.b32.xlu0 %v1573, 16
    %v1583 = vpop.permute.xlu0 %1582
    %v1586 = vsel %vm306, %v1429, %v1581
    %v1587 = vsel %vm306, %v1477, %v1583
    %v1588 = vpack.c.bf16 %v1587, %v1586
    %s1589 = scalar_lea.vmem [#allocation11], 16
    %v1590 = vld [vmem:[%s1589] sm:$0xf]
    %v1591 = vld [vmem:[%s1589 + $0x4] sm:$0xf]
    %v1592 = vld [vmem:[%s1589 + $0x8] sm:$0xf]
    %v1593 = vld [vmem:[%s1589 + $0xc] sm:$0xf]
    %v1594 = vlaneseq
    %v1595 = vshrl.u32 %v1594, 7
    %v1596 = vsub.s32 1, %v1595
    %v1597 = vrot.slane %v1063, %v1596
    %v1602 = vunpack.c.l.b16 %v1590
    %v1603 = vunpack.c.l.b16 %v1591
    %v1604 = vunpack.c.l.b16 %v1592
    %v1605 = vunpack.c.l.b16 %v1593
    %v1606 = vpack.c.b16 %v1603, %v1602
    %v1607 = vpack.c.b16 %v1605, %v1604
    %v1611 = vsel %vm157, %v1588, 0
    %1613 = vmatprep.subr.bf16.mxu0 0
    %1614 = vmatpush1.bf16.msra.mxu0 %v1606
    %1615 = vmatprep.subr.bf16.mxu0 0
    %1616 = vmatpush1.bf16.msra.mxu0 %v1607
    %1617 = vmatprep.subr.bf16.mxu0 0
    %1618 = vmatpush1.bf16.msra.mxu0 0
    %1619 = vmatprep.subr.bf16.mxu0 0
    %1620 = vmatpush1.bf16.msra.mxu0 0
    %1621 = vmatprep.subr.bf16.mxu0 0
    %1622 = vmatpush1.bf16.msra.mxu0 0
    %1623 = vmatprep.subr.bf16.mxu0 0
    %1624 = vmatpush1.bf16.msra.mxu0 0
    %1625 = vmatprep.subr.bf16.mxu0 0
    %1626 = vmatpush1.bf16.msra.mxu0 0
    %1627 = vmatprep.subr.bf16.mxu0 0
    %1628 = vmatpush1.bf16.msra.mxu0 0
    %1629 = vmatprep.subr.bf16.mxu0 0
    %1630 = vmatpush1.bf16.msra.mxu0 0
    %1631 = vmatprep.subr.bf16.mxu0 0
    %1632 = vmatpush1.bf16.msra.mxu0 0
    %1633 = vmatprep.subr.bf16.mxu0 0
    %1634 = vmatpush1.bf16.msra.mxu0 0
    %1635 = vmatprep.subr.bf16.mxu0 0
    %1636 = vmatpush1.bf16.msra.mxu0 0
    %1637 = vmatprep.subr.bf16.mxu0 0
    %1638 = vmatpush1.bf16.msra.mxu0 0
    %1639 = vmatprep.subr.bf16.mxu0 0
    %1640 = vmatpush1.bf16.msra.mxu0 0
    %1641 = vmatprep.subr.bf16.mxu0 0
    %1642 = vmatpush1.bf16.msra.mxu0 0
    %1643 = vmatprep.subr.bf16.mxu0 0
    %1644 = vmatpush1.bf16.msra.mxu0 0
    %1645 = vmatprep.mubr.bf16.mxu0 0
    %1646 = vmatmul.mubr.bf16.gmra.mrb[0].mxu0 %v1611
    %v1647 = vpop.f32.mrb[0].mxu0
    %v1648 = vadd.f32 %v1597, %v1647
    %v1649 = vpop.f32.mrb[0].mxu0
    %v1650 = vpop.f32.mrb[0].mxu0
    %v1651 = vadd.f32 %v1597, %v1650
    %v1652 = vpop.f32.mrb[0].mxu0
    %1653 = vdwg.mxu0
    %v1654 = vadd.f32 %v1060, %v1648
    %v1655 = vadd.f32 %v1061, %v1651
    %v1656 = vsel %vm157, %v1654, 0.0
    %1657 = vadd.xlane.f32.xlu0 %v1656
    %v1658 = vpop.xlane.xlu0 %1657
    %v1659 = vsel %vm157, %v1655, 0.0
    %1660 = vadd.xlane.f32.xlu0 %v1659
    %v1661 = vpop.xlane.xlu0 %1660
    %v1662 = vmul.f32 %v1658, %v164
    %v1663 = vmul.f32 %v1661, %v164
    %v1664 = vsub.f32 %v1654, %v1662
    %v1665 = vsub.f32 %v1655, %v1663
    %v1666 = vmul.f32 %v1664, %v1664
    %v1667 = vmul.f32 %v1665, %v1665
    %v1668 = vsel %vm157, %v1666, 0.0
    %1669 = vadd.xlane.f32.xlu0 %v1668
    %v1670 = vpop.xlane.xlu0 %1669
    %v1671 = vsel %vm157, %v1667, 0.0
    %1672 = vadd.xlane.f32.xlu0 %v1671
    %v1673 = vpop.xlane.xlu0 %1672
    %v1674 = vmul.f32 %v1670, %v164
    %v1675 = vmul.f32 %v1673, %v164
    %v1676 = vadd.f32 %v1674, 1e-12
    %v1677 = vadd.f32 %v1675, 1e-12
    %v1678 = vrsqrt.pop %v1676
    %v1679 = vrsqrt.pop %v1677
    %v1680 = vmul.f32 %v1664, %v1678
    %v1681 = vmul.f32 %v1665, %v1679
    %v1682 = vlaneseq
    %v1683 = vshrl.u32 %v1682, 7
    %v1684 = vsub.s32 2, %v1683
    %v1685 = vrot.slane %v1063, %v1684
    %v1686 = vmul.f32 %v1680, %v1685
    %v1687 = vmul.f32 %v1681, %v1685
    %v1688 = vlaneseq
    %v1689 = vshrl.u32 %v1688, 7
    %v1690 = vsub.s32 3, %v1689
    %v1691 = vrot.slane %v1063, %v1690
    %v1692 = vadd.f32 %v1686, %v1691
    %v1693 = vadd.f32 %v1687, %v1691
    %v1694 = vpack.c.bf16 %v1693, %v1692
    %s1695 = scalar_lea.vmem [#allocation13], 16
    %v1696 = vld [vmem:[%s1695] sm:$0xf]
    %v1697 = vld [vmem:[%s1695 + $0x4] sm:$0xf]
    %v1698 = vld [vmem:[%s1695 + $0x8] sm:$0xf]
    %v1699 = vld [vmem:[%s1695 + $0xc] sm:$0xf]
    %v1700 = vlaneseq
    %v1701 = vshrl.u32 %v1700, 7
    %v1702 = vsub.s32 4, %v1701
    %v1703 = vrot.slane %v1063, %v1702
    %v1708 = vunpack.c.l.b16 %v1696
    %v1709 = vunpack.c.l.b16 %v1697
    %v1710 = vunpack.c.l.b16 %v1698
    %v1711 = vunpack.c.l.b16 %v1699
    %v1712 = vpack.c.b16 %v1709, %v1708
    %v1713 = vpack.c.b16 %v1711, %v1710
    %v1717 = vsel %vm157, %v1694, 0
    %1719 = vmatprep.subr.bf16.mxu0 0
    %1720 = vmatpush1.bf16.msra.mxu0 %v1712
    %1721 = vmatprep.subr.bf16.mxu0 0
    %1722 = vmatpush1.bf16.msra.mxu0 %v1713
    %1723 = vmatprep.subr.bf16.mxu0 0
    %1724 = vmatpush1.bf16.msra.mxu0 0
    %1725 = vmatprep.subr.bf16.mxu0 0
    %1726 = vmatpush1.bf16.msra.mxu0 0
    %1727 = vmatprep.subr.bf16.mxu0 0
    %1728 = vmatpush1.bf16.msra.mxu0 0
    %1729 = vmatprep.subr.bf16.mxu0 0
    %1730 = vmatpush1.bf16.msra.mxu0 0
    %1731 = vmatprep.subr.bf16.mxu0 0
    %1732 = vmatpush1.bf16.msra.mxu0 0
    %1733 = vmatprep.subr.bf16.mxu0 0
    %1734 = vmatpush1.bf16.msra.mxu0 0
    %1735 = vmatprep.subr.bf16.mxu0 0
    %1736 = vmatpush1.bf16.msra.mxu0 0
    %1737 = vmatprep.subr.bf16.mxu0 0
    %1738 = vmatpush1.bf16.msra.mxu0 0
    %1739 = vmatprep.subr.bf16.mxu0 0
    %1740 = vmatpush1.bf16.msra.mxu0 0
    %1741 = vmatprep.subr.bf16.mxu0 0
    %1742 = vmatpush1.bf16.msra.mxu0 0
    %1743 = vmatprep.subr.bf16.mxu0 0
    %1744 = vmatpush1.bf16.msra.mxu0 0
    %1745 = vmatprep.subr.bf16.mxu0 0
    %1746 = vmatpush1.bf16.msra.mxu0 0
    %1747 = vmatprep.subr.bf16.mxu0 0
    %1748 = vmatpush1.bf16.msra.mxu0 0
    %1749 = vmatprep.subr.bf16.mxu0 0
    %1750 = vmatpush1.bf16.msra.mxu0 0
    %1751 = vmatprep.mubr.bf16.mxu0 0
    %1752 = vmatmul.mubr.bf16.gmra.mrb[0].mxu0 %v1717
    %v1753 = vpop.f32.mrb[0].mxu0
    %v1754 = vadd.f32 %v1703, %v1753
    %v1755 = vpop.f32.mrb[0].mxu0
    %v1756 = vpop.f32.mrb[0].mxu0
    %v1757 = vadd.f32 %v1703, %v1756
    %v1758 = vpop.f32.mrb[0].mxu0
    %1759 = vdwg.mxu0
    %v1760 = vmul.f32 %v1754, 0.5
    %v1761 = vmul.f32 %v1757, 0.5
    %v1762 = vmul.f32 %v1754, 0.044715
    %v1763 = vmul.f32 %v1757, 0.044715
    %v1764 = vmul.f32 %v1762, %v1754
    %v1765 = vmul.f32 %v1763, %v1757
    %v1766 = vmul.f32 %v1764, %v1754
    %v1767 = vmul.f32 %v1765, %v1757
    %v1768 = vadd.f32 %v1754, %v1766
    %v1769 = vadd.f32 %v1757, %v1767
    %v1770 = vmul.f32 %v1768, 0.7978846
    %v1771 = vmul.f32 %v1769, 0.7978846
    %v1772 = vtanh.pop %v1770
    %v1773 = vtanh.pop %v1771
    %v1774 = vadd.f32 %v1772, 1.0
    %v1775 = vadd.f32 %v1773, 1.0
    %v1776 = vmul.f32 %v1760, %v1774
    %v1777 = vmul.f32 %v1761, %v1775
    %v1778 = vpack.c.bf16 %v1777, %v1776
    %s1779 = scalar_lea.vmem [#allocation14], 32
    %v1780 = vld [vmem:[%s1779] sm:$0xf]
    %v1781 = vld [vmem:[%s1779 + $0x4] sm:$0xf]
    %v1782 = vld [vmem:[%s1779 + $0x8] sm:$0xf]
    %v1783 = vld [vmem:[%s1779 + $0xc] sm:$0xf]
    %v1784 = vld [vmem:[%s1779 + $0x10] sm:$0xf]
    %v1785 = vld [vmem:[%s1779 + $0x14] sm:$0xf]
    %v1786 = vld [vmem:[%s1779 + $0x18] sm:$0xf]
    %v1787 = vld [vmem:[%s1779 + $0x1c] sm:$0xf]
    %v1788 = vlaneseq
    %v1789 = vshrl.u32 %v1788, 7
    %v1790 = vsub.s32 5, %v1789
    %v1791 = vrot.slane %v1063, %v1790
    %v1800 = vunpack.c.l.b16 %v1780
    %v1801 = vunpack.c.l.b16 %v1781
    %v1802 = vunpack.c.l.b16 %v1782
    %v1803 = vunpack.c.l.b16 %v1783
    %v1804 = vunpack.c.l.b16 %v1784
    %v1805 = vunpack.c.l.b16 %v1785
    %v1806 = vunpack.c.l.b16 %v1786
    %v1807 = vunpack.c.l.b16 %v1787
    %v1808 = vpack.c.b16 %v1801, %v1800
    %v1809 = vpack.c.b16 %v1803, %v1802
    %v1810 = vpack.c.b16 %v1805, %v1804
    %v1811 = vpack.c.b16 %v1807, %v1806
    %v1817 = vsel %vm977, %v1778, 0
    %1819 = vmatprep.subr.bf16.mxu0 0
    %1820 = vmatpush1.bf16.msra.mxu0 %v1808
    %1821 = vmatprep.subr.bf16.mxu0 0
    %1822 = vmatpush1.bf16.msra.mxu0 %v1809
    %1823 = vmatprep.subr.bf16.mxu0 0
    %1824 = vmatpush1.bf16.msra.mxu0 %v1810
    %1825 = vmatprep.subr.bf16.mxu0 0
    %1826 = vmatpush1.bf16.msra.mxu0 %v1811
    %1827 = vmatprep.subr.bf16.mxu0 0
    %1828 = vmatpush1.bf16.msra.mxu0 0
    %1829 = vmatprep.subr.bf16.mxu0 0
    %1830 = vmatpush1.bf16.msra.mxu0 0
    %1831 = vmatprep.subr.bf16.mxu0 0
    %1832 = vmatpush1.bf16.msra.mxu0 0
    %1833 = vmatprep.subr.bf16.mxu0 0
    %1834 = vmatpush1.bf16.msra.mxu0 0
    %1835 = vmatprep.subr.bf16.mxu0 0
    %1836 = vmatpush1.bf16.msra.mxu0 0
    %1837 = vmatprep.subr.bf16.mxu0 0
    %1838 = vmatpush1.bf16.msra.mxu0 0
    %1839 = vmatprep.subr.bf16.mxu0 0
    %1840 = vmatpush1.bf16.msra.mxu0 0
    %1841 = vmatprep.subr.bf16.mxu0 0
    %1842 = vmatpush1.bf16.msra.mxu0 0
    %1843 = vmatprep.subr.bf16.mxu0 0
    %1844 = vmatpush1.bf16.msra.mxu0 0
    %1845 = vmatprep.subr.bf16.mxu0 0
    %1846 = vmatpush1.bf16.msra.mxu0 0
    %1847 = vmatprep.subr.bf16.mxu0 0
    %1848 = vmatpush1.bf16.msra.mxu0 0
    %1849 = vmatprep.subr.bf16.mxu0 0
    %1850 = vmatpush1.bf16.msra.mxu0 0
    %1851 = vmatprep.mubr.bf16.mxu0 0
    %1852 = vmatmul.mubr.bf16.gmra.mrb[0].mxu0 %v1817
    %v1853 = vpop.f32.mrb[0].mxu0
    %v1854 = vadd.f32 %v1791, %v1853
    %v1855 = vpop.f32.mrb[0].mxu0
    %v1856 = vpop.f32.mrb[0].mxu0
    %v1857 = vadd.f32 %v1791, %v1856
    %v1858 = vpop.f32.mrb[0].mxu0
    %1859 = vdwg.mxu0
    %v1860 = vadd.f32 %v1692, %v1854
    %v1861 = vadd.f32 %v1693, %v1857
    %v1862 = vsel %vm157, %v1860, 0.0
    %1863 = vadd.xlane.f32.xlu0 %v1862
    %v1864 = vpop.xlane.xlu0 %1863
    %v1865 = vsel %vm157, %v1861, 0.0
    %1866 = vadd.xlane.f32.xlu0 %v1865
    %v1867 = vpop.xlane.xlu0 %1866
    %v1868 = vmul.f32 %v1864, %v164
    %v1869 = vmul.f32 %v1867, %v164
    %v1870 = vsub.f32 %v1860, %v1868
    %v1871 = vsub.f32 %v1861, %v1869
    %v1872 = vmul.f32 %v1870, %v1870
    %v1873 = vmul.f32 %v1871, %v1871
    %v1874 = vsel %vm157, %v1872, 0.0
    %1875 = vadd.xlane.f32.xlu0 %v1874
    %v1876 = vpop.xlane.xlu0 %1875
    %v1877 = vsel %vm157, %v1873, 0.0
    %1878 = vadd.xlane.f32.xlu0 %v1877
    %v1879 = vpop.xlane.xlu0 %1878
    %v1880 = vmul.f32 %v1876, %v164
    %v1881 = vmul.f32 %v1879, %v164
    %v1882 = vadd.f32 %v1880, 1e-12
    %v1883 = vadd.f32 %v1881, 1e-12
    %v1884 = vrsqrt.pop %v1882
    %v1885 = vrsqrt.pop %v1883
    %v1886 = vmul.f32 %v1870, %v1884
    %v1887 = vmul.f32 %v1871, %v1885
    %v1888 = vlaneseq
    %v1889 = vshrl.u32 %v1888, 7
    %v1890 = vsub.s32 6, %v1889
    %v1891 = vrot.slane %v1063, %v1890
    %v1892 = vmul.f32 %v1886, %v1891
    %v1893 = vmul.f32 %v1887, %v1891
    %v1894 = vlaneseq
    %v1895 = vshrl.u32 %v1894, 7
    %v1896 = vsub.s32 7, %v1895
    %v1897 = vrot.slane %v1063, %v1896
    %v1898 = vadd.f32 %v1892, %v1897
    %v1899 = vadd.f32 %v1893, %v1897
    %v1900 = vpack.c.bf16 %v1899, %v1898
    %v1901 = vld [vmem:[#allocation16] sm:$0xf]
    %v1902 = vld [vmem:[#allocation16 + $0x4] sm:$0xf]
    %v1903 = vld [vmem:[#allocation16 + $0x8] sm:$0xf]
    %v1904 = vld [vmem:[#allocation16 + $0xc] sm:$0xf]
    %v1905 = vlaneseq
    %v1906 = vshrl.u32 %v1905, 7
    %v1907 = vsub.s32 2, %v1906
    %v1908 = vrot.slane %v154, %v1907
    %v1913 = vunpack.c.l.b16 %v1901
    %v1914 = vunpack.c.l.b16 %v1902
    %v1915 = vunpack.c.l.b16 %v1903
    %v1916 = vunpack.c.l.b16 %v1904
    %v1917 = vpack.c.b16 %v1914, %v1913
    %v1918 = vpack.c.b16 %v1916, %v1915
    %v1922 = vsel %vm157, %v1900, 0
    %1924 = vmatprep.subr.bf16.mxu0 0
    %1925 = vmatpush1.bf16.msra.mxu0 %v1917
    %1926 = vmatprep.subr.bf16.mxu0 0
    %1927 = vmatpush1.bf16.msra.mxu0 %v1918
    %1928 = vmatprep.subr.bf16.mxu0 0
    %1929 = vmatpush1.bf16.msra.mxu0 0
    %1930 = vmatprep.subr.bf16.mxu0 0
    %1931 = vmatpush1.bf16.msra.mxu0 0
    %1932 = vmatprep.subr.bf16.mxu0 0
    %1933 = vmatpush1.bf16.msra.mxu0 0
    %1934 = vmatprep.subr.bf16.mxu0 0
    %1935 = vmatpush1.bf16.msra.mxu0 0
    %1936 = vmatprep.subr.bf16.mxu0 0
    %1937 = vmatpush1.bf16.msra.mxu0 0
    %1938 = vmatprep.subr.bf16.mxu0 0
    %1939 = vmatpush1.bf16.msra.mxu0 0
    %1940 = vmatprep.subr.bf16.mxu0 0
    %1941 = vmatpush1.bf16.msra.mxu0 0
    %1942 = vmatprep.subr.bf16.mxu0 0
    %1943 = vmatpush1.bf16.msra.mxu0 0
    %1944 = vmatprep.subr.bf16.mxu0 0
    %1945 = vmatpush1.bf16.msra.mxu0 0
    %1946 = vmatprep.subr.bf16.mxu0 0
    %1947 = vmatpush1.bf16.msra.mxu0 0
    %1948 = vmatprep.subr.bf16.mxu0 0
    %1949 = vmatpush1.bf16.msra.mxu0 0
    %1950 = vmatprep.subr.bf16.mxu0 0
    %1951 = vmatpush1.bf16.msra.mxu0 0
    %1952 = vmatprep.subr.bf16.mxu0 0
    %1953 = vmatpush1.bf16.msra.mxu0 0
    %1954 = vmatprep.subr.bf16.mxu0 0
    %1955 = vmatpush1.bf16.msra.mxu0 0
    %1956 = vmatprep.mubr.bf16.mxu0 0
    %1957 = vmatmul.mubr.bf16.gmra.mrb[0].mxu0 %v1922
    %v1958 = vpop.f32.mrb[0].mxu0
    %v1959 = vadd.f32 %v1908, %v1958
    %v1960 = vpop.f32.mrb[0].mxu0
    %v1961 = vpop.f32.mrb[0].mxu0
    %v1962 = vadd.f32 %v1908, %v1961
    %v1963 = vpop.f32.mrb[0].mxu0
    %1964 = vdwg.mxu0
    %1965 = vst [vmem:[#allocation17] sm:$0xff] %v1959
    %1966 = vst [vmem:[#allocation17 + $0x8] sm:$0xff] %v1962
    // Predicated region
    $region74: #{text_encoder_forward.1} parent=1 // pred_check
      _
    $region75: #{text_encoder_forward.1} parent=1 // pred_check_branch
      %1968 = sbr.rel (0) target = $region77
    $region76: #{text_encoder_forward.1} parent=1 // pred_region
      %s1970 = ssub.s32 256, 256
      %1971 = vsyncadd [#allocation4], %s1970
      %s1972 = sshll.u32 [#allocation17], 4
      %s1973 = int_to_ptr.vmem [resolvable:$true] %s1972
      %1978 = dma.vmem_to_hbm [thread:$0]  %s1973, 256, %s9, [#allocation4], 128, 128, 8
    $region77: #{text_encoder_forward.1} parent=1 // pred_fallthru
      _
    // Predicated region
    $region78: #{text_encoder_forward.1} parent=1 // pred_check
      _
    $region79: #{text_encoder_forward.1} parent=1 // pred_check_branch
      %1980 = sbr.rel (0) target = $region81
    $region80: #{text_encoder_forward.1} parent=1 // pred_region
      %1981 = dma.done [#allocation4], 256
    $region81: #{text_encoder_forward.1} parent=1 // pred_fallthru
      _
    %1982 = vsyncpa [#allocation3], 1
    %1983 = vsyncpa [#allocation6], 1
    %1984 = vsyncpa [#allocation9], 1
    %1985 = vsyncpa [#allocation12], 1
    %1986 = vsyncpa [#allocation15], 1
    %1987 = vsyncpa [#allocation4], 1

</llo_original>
